<compile_context>
chip_gen: v6e
topology: v6e:2x2x1
jax: 0.10.0
libtpu: 0.0.40
codegen_flags: <defaults>
</compile_context>

<pallas_src>
import functools

import jax
import jax.numpy as jnp
from jax.experimental import pallas as pl
from jax.experimental.pallas import tpu as pltpu

GRID_SIZE = 4
SPLINE_ORDER = 3


# ----------------------------------------------------------------------------
# In-kernel KAN feature construction (constant uniform knots, no divides)
# ----------------------------------------------------------------------------
def _kan_feature_slab(x, grid_size, spline_order):
    """Return [silu(x) | B_0(x) | ... | B_{G+k-1}(x)] lane-concatenated.

    x: (N, Fin) f32  ->  (N, (1 + G + k) * Fin) f32.
    Knots of the (untrained) efficient-kan grid over [-1, 1] are baked as
    Python float constants; uniform spacing makes every Cox-de-Boor
    denominator equal to p*h, so divisions become constant multiplies.
    """
    k = spline_order
    G = grid_size
    h = 2.0 / G  # grid_range = [-1, 1]
    t = [(-1.0 + (j - k) * h) for j in range(G + 2 * k + 1)]  # python floats

    # order-0 indicator bases (half-open intervals, matches efficient-kan)
    bases = [((x >= t[j]) & (x < t[j + 1])).astype(x.dtype) for j in range(G + 2 * k)]

    # Cox-de Boor recursion with constant reciprocal denominators
    for p in range(1, k + 1):
        inv = 1.0 / (p * h)
        new_bases = [
            ((x - t[j]) * bases[j] + (t[j + p + 1] - x) * bases[j + 1]) * inv
            for j in range(G + 2 * k - p)
        ]
        bases = new_bases  # G + k arrays at the end, each (N, Fin)

    return jnp.concatenate([jax.nn.silu(x)] + bases, axis=-1)


# ----------------------------------------------------------------------------
# Fused Pallas kernel: all conv layers + readout + log_softmax
# ----------------------------------------------------------------------------
def kagcn_fused_kernel(*refs, gnn_layers, grid_size, spline_order, num_classes):
    # refs = [x, adj, (w_0, bias_0), ..., (w_{L-1}, bias_{L-1}), w_readout, out]
    x_ref, adj_ref = refs[0], refs[1]
    wr_ref = refs[2 + 2 * gnn_layers]
    out_ref = refs[3 + 2 * gnn_layers]

    adj = adj_ref[...].astype(jnp.bfloat16)  # bf16 at the MXU, f32 accumulation
    h = x_ref[...]                            # (N, Fin) f32

    for i in range(gnn_layers):
        w_ref = refs[2 + 2 * i]   # ((1+G+k)*Fin, H) bf16, base+spline pre-packed
        b_ref = refs[3 + 2 * i]   # (1, H) f32, GCNConv bias
        slab = _kan_feature_slab(h, grid_size, spline_order)
        kan = jnp.dot(slab.astype(jnp.bfloat16), w_ref[...],
                      preferred_element_type=jnp.float32)        # KANLinear(h)
        agg = jnp.dot(adj, kan.astype(jnp.bfloat16),
                      preferred_element_type=jnp.float32) + b_ref[...]
        h = jax.nn.silu(agg)      # F.silu after the conv
        # dropout: identity (eval mode)

    # Readout KANLinear -> padded, lane-dense logits (N, C_pad)
    slab = _kan_feature_slab(h, grid_size, spline_order)
    logits = jnp.dot(slab.astype(jnp.bfloat16), wr_ref[...],
                     preferred_element_type=jnp.float32)

    # log_softmax over the real classes only (padded lanes masked out)
    col = jax.lax.broadcasted_iota(jnp.int32, (1, logits.shape[-1]), 1)
    logits = jnp.where(col < num_classes, logits, -1e30)
    m = jnp.max(logits, axis=-1, keepdims=True)
    shifted = logits - m
    lse = jnp.log(jnp.sum(jnp.exp(shifted), axis=-1, keepdims=True))
    out_ref[...] = shifted - lse


# ----------------------------------------------------------------------------
# Wrapper
# ----------------------------------------------------------------------------
def kagcn_cls_forward(params, x, adj, *, num_classes, node_level=True):
    if not node_level:
        # TODO(synk): implement global_mean_pool + readout path for graph-level.
        raise NotImplementedError("only node_level=True is implemented")

    n = x.shape[0]
    pad_n = (-n) % 8  # keep sublane-aligned row count
    if pad_n:
        x = jnp.pad(x, ((0, pad_n), (0, 0)))
        adj = jnp.pad(adj, ((0, pad_n), (0, pad_n)))
    n_total = n + pad_n
    c_pad = params["readout_w"].shape[1]  # 128-lane padded class dim

    inputs = [x, adj]
    for layer in params["conv"]:
        inputs += [layer["w"], layer["bias"]]
    inputs.append(params["readout_w"])

    kernel = functools.partial(
        kagcn_fused_kernel,
        gnn_layers=len(params["conv"]),
        grid_size=GRID_SIZE,
        spline_order=SPLINE_ORDER,
        num_classes=num_classes,
    )
    vmem_spec = pl.BlockSpec(memory_space=pltpu.MemorySpace.VMEM)
    out = pl.pallas_call(
        kernel,
        out_shape=jax.ShapeDtypeStruct((n_total, c_pad), jnp.float32),
        in_specs=[vmem_spec] * len(inputs),
        out_specs=vmem_spec,
        compiler_params=pltpu.CompilerParams(vmem_limit_bytes=32 * 1024 * 1024),
    )(*inputs)
    return out[:n, :num_classes]


# ----------------------------------------------------------------------------
# Glue: parameter init (pre-packed weights), adjacency normalization
# ----------------------------------------------------------------------------
def init_kan_packed_weight(key, in_f, out_f, grid_size, spline_order,
                           scale=0.1, out_pad=None):
    """Build one packed KANLinear weight of shape ((1+G+k)*in_f, out_f[_pad]) bf16.

    Row layout matches the in-kernel slab: first in_f rows = base (SiLU) path,
    then for each spline coefficient b: in_f rows (spline_scaler folded in).
    """
    k1, k2, k3 = jax.random.split(key, 3)
    base_w = scale * jax.random.normal(k1, (out_f, in_f), jnp.float32)
    spline_w = scale * jax.random.normal(
        k2, (out_f, in_f, grid_size + spline_order), jnp.float32)
    spline_scaler = 1.0 + 0.05 * jax.random.normal(k3, (out_f, in_f), jnp.float32)
    scaled = spline_w * spline_scaler[..., None]                 # (out, in, G+k)
    spline_block = jnp.transpose(scaled, (2, 1, 0)).reshape(
        (grid_size + spline_order) * in_f, out_f)                # row = b*in_f + f
    w = jnp.concatenate([base_w.T, spline_block], axis=0)        # ((1+G+k)*in_f, out)
    if out_pad is not None and out_pad > out_f:
        w = jnp.pad(w, ((0, 0), (0, out_pad - out_f)))           # lane-dense padding
    return w.astype(jnp.bfloat16)


def build_norm_adj(edge_index, num_nodes):
    """Dense D^-1/2 (A + I) D^-1/2 (GCN normalization with self-loops)."""
    src, dst = edge_index[0], edge_index[1]
    adj = jnp.zeros((num_nodes, num_nodes), jnp.float32)
    adj = adj.at[dst, src].add(1.0)                    # message flow: src -> dst
    adj = adj + jnp.eye(num_nodes, dtype=jnp.float32)  # self-loops
    deg = jnp.sum(adj, axis=1)
    dinv = jnp.where(deg > 0, 1.0 / jnp.sqrt(deg), 0.0)
    return adj * dinv[:, None] * dinv[None, :]


# ----------------------------------------------------------------------------
if __name__ == "__main__":
    key = jax.random.PRNGKey(0)
    N, NUM_FEATURES, HIDDEN_DIM, NUM_CLASSES = 16, 8, 32, 4
    GNN_LAYERS = 2
    C_PAD = max(128, -(-NUM_CLASSES // 128) * 128)

    kx, ke, kp = jax.random.split(key, 3)

    # inputs
    x = jax.random.normal(kx, (N, NUM_FEATURES), jnp.float32)
    n_edges = 24
    src = jax.random.randint(ke, (n_edges,), 0, N)
    dst = jax.random.randint(jax.random.fold_in(ke, 1), (n_edges,), 0, N)
    edge_index = jnp.stack(
        [jnp.concatenate([src, dst]), jnp.concatenate([dst, src])]
    )  # undirected
    adj = build_norm_adj(edge_index, N)

    # parameters (deterministic, synthetic)
    keys = jax.random.split(kp, GNN_LAYERS + 1)
    conv_params = []
    in_f = NUM_FEATURES
    for i in range(GNN_LAYERS):
        w = init_kan_packed_weight(keys[i], in_f, HIDDEN_DIM, GRID_SIZE, SPLINE_ORDER)
        conv_params.append(
            {"w": w, "bias": jnp.zeros((1, HIDDEN_DIM), jnp.float32)}  # GCNConv bias
        )
        in_f = HIDDEN_DIM
    readout_w = init_kan_packed_weight(
        keys[-1], HIDDEN_DIM, NUM_CLASSES, GRID_SIZE, SPLINE_ORDER, out_pad=C_PAD
    )
    params = {"conv": conv_params, "readout_w": readout_w}

    out = kagcn_cls_forward(params, x, adj, num_classes=NUM_CLASSES, node_level=True)
    jax.block_until_ready(out)
    assert out.shape == (N, NUM_CLASSES)
    assert bool(jnp.all(jnp.isfinite(out)))
    print("KERNEL_OK")
</pallas_src>

<mosaic_0001>
module attributes {stable_mosaic.version = 11 : i64} {
  func.func @kagcn_fused_kernel(%arg0: memref<16x8xf32, #tpu.memory_space<vmem>>, %arg1: memref<16x16xf32, #tpu.memory_space<vmem>>, %arg2: memref<64x32xbf16, #tpu.memory_space<vmem>>, %arg3: memref<1x32xf32, #tpu.memory_space<vmem>>, %arg4: memref<256x32xbf16, #tpu.memory_space<vmem>>, %arg5: memref<1x32xf32, #tpu.memory_space<vmem>>, %arg6: memref<256x128xbf16, #tpu.memory_space<vmem>>, %arg7: memref<16x128xf32, #tpu.memory_space<vmem>>) attributes {dimension_semantics = [], scalar_prefetch = 0 : i64, scratch_operands = 0 : i64, tpu.core_type = #tpu.core_type<tc>} {
    %c0 = arith.constant 0 : index
    %c0_0 = arith.constant 0 : index
    %0 = vector.load %arg1[%c0, %c0_0] : memref<16x16xf32, #tpu.memory_space<vmem>>, vector<16x16xf32>
    %1 = arith.truncf %0 : vector<16x16xf32> to vector<16x16xbf16>
    %c0_1 = arith.constant 0 : index
    %c0_2 = arith.constant 0 : index
    %2 = vector.load %arg0[%c0_1, %c0_2] : memref<16x8xf32, #tpu.memory_space<vmem>>, vector<16x8xf32>
    %cst = arith.constant -2.500000e+00 : f32
    %3 = vector.broadcast %cst : f32 to vector<16x8xf32>
    %4 = arith.cmpf oge, %2, %3 : vector<16x8xf32>
    %cst_3 = arith.constant -2.000000e+00 : f32
    %5 = vector.broadcast %cst_3 : f32 to vector<16x8xf32>
    %6 = arith.cmpf olt, %2, %5 : vector<16x8xf32>
    %7 = arith.andi %4, %6 : vector<16x8xi1>
    %8 = arith.extui %7 : vector<16x8xi1> to vector<16x8xi32>
    %9 = arith.sitofp %8 : vector<16x8xi32> to vector<16x8xf32>
    %cst_4 = arith.constant -2.000000e+00 : f32
    %10 = vector.broadcast %cst_4 : f32 to vector<16x8xf32>
    %11 = arith.cmpf oge, %2, %10 : vector<16x8xf32>
    %cst_5 = arith.constant -1.500000e+00 : f32
    %12 = vector.broadcast %cst_5 : f32 to vector<16x8xf32>
    %13 = arith.cmpf olt, %2, %12 : vector<16x8xf32>
    %14 = arith.andi %11, %13 : vector<16x8xi1>
    %15 = arith.extui %14 : vector<16x8xi1> to vector<16x8xi32>
    %16 = arith.sitofp %15 : vector<16x8xi32> to vector<16x8xf32>
    %cst_6 = arith.constant -1.500000e+00 : f32
    %17 = vector.broadcast %cst_6 : f32 to vector<16x8xf32>
    %18 = arith.cmpf oge, %2, %17 : vector<16x8xf32>
    %cst_7 = arith.constant -1.000000e+00 : f32
    %19 = vector.broadcast %cst_7 : f32 to vector<16x8xf32>
    %20 = arith.cmpf olt, %2, %19 : vector<16x8xf32>
    %21 = arith.andi %18, %20 : vector<16x8xi1>
    %22 = arith.extui %21 : vector<16x8xi1> to vector<16x8xi32>
    %23 = arith.sitofp %22 : vector<16x8xi32> to vector<16x8xf32>
    %cst_8 = arith.constant -1.000000e+00 : f32
    %24 = vector.broadcast %cst_8 : f32 to vector<16x8xf32>
    %25 = arith.cmpf oge, %2, %24 : vector<16x8xf32>
    %cst_9 = arith.constant -5.000000e-01 : f32
    %26 = vector.broadcast %cst_9 : f32 to vector<16x8xf32>
    %27 = arith.cmpf olt, %2, %26 : vector<16x8xf32>
    %28 = arith.andi %25, %27 : vector<16x8xi1>
    %29 = arith.extui %28 : vector<16x8xi1> to vector<16x8xi32>
    %30 = arith.sitofp %29 : vector<16x8xi32> to vector<16x8xf32>
    %cst_10 = arith.constant -5.000000e-01 : f32
    %31 = vector.broadcast %cst_10 : f32 to vector<16x8xf32>
    %32 = arith.cmpf oge, %2, %31 : vector<16x8xf32>
    %cst_11 = arith.constant 0.000000e+00 : f32
    %33 = vector.broadcast %cst_11 : f32 to vector<16x8xf32>
    %34 = arith.cmpf olt, %2, %33 : vector<16x8xf32>
    %35 = arith.andi %32, %34 : vector<16x8xi1>
    %36 = arith.extui %35 : vector<16x8xi1> to vector<16x8xi32>
    %37 = arith.sitofp %36 : vector<16x8xi32> to vector<16x8xf32>
    %cst_12 = arith.constant 0.000000e+00 : f32
    %38 = vector.broadcast %cst_12 : f32 to vector<16x8xf32>
    %39 = arith.cmpf oge, %2, %38 : vector<16x8xf32>
    %cst_13 = arith.constant 5.000000e-01 : f32
    %40 = vector.broadcast %cst_13 : f32 to vector<16x8xf32>
    %41 = arith.cmpf olt, %2, %40 : vector<16x8xf32>
    %42 = arith.andi %39, %41 : vector<16x8xi1>
    %43 = arith.extui %42 : vector<16x8xi1> to vector<16x8xi32>
    %44 = arith.sitofp %43 : vector<16x8xi32> to vector<16x8xf32>
    %cst_14 = arith.constant 5.000000e-01 : f32
    %45 = vector.broadcast %cst_14 : f32 to vector<16x8xf32>
    %46 = arith.cmpf oge, %2, %45 : vector<16x8xf32>
    %cst_15 = arith.constant 1.000000e+00 : f32
    %47 = vector.broadcast %cst_15 : f32 to vector<16x8xf32>
    %48 = arith.cmpf olt, %2, %47 : vector<16x8xf32>
    %49 = arith.andi %46, %48 : vector<16x8xi1>
    %50 = arith.extui %49 : vector<16x8xi1> to vector<16x8xi32>
    %51 = arith.sitofp %50 : vector<16x8xi32> to vector<16x8xf32>
    %cst_16 = arith.constant 1.000000e+00 : f32
    %52 = vector.broadcast %cst_16 : f32 to vector<16x8xf32>
    %53 = arith.cmpf oge, %2, %52 : vector<16x8xf32>
    %cst_17 = arith.constant 1.500000e+00 : f32
    %54 = vector.broadcast %cst_17 : f32 to vector<16x8xf32>
    %55 = arith.cmpf olt, %2, %54 : vector<16x8xf32>
    %56 = arith.andi %53, %55 : vector<16x8xi1>
    %57 = arith.extui %56 : vector<16x8xi1> to vector<16x8xi32>
    %58 = arith.sitofp %57 : vector<16x8xi32> to vector<16x8xf32>
    %cst_18 = arith.constant 1.500000e+00 : f32
    %59 = vector.broadcast %cst_18 : f32 to vector<16x8xf32>
    %60 = arith.cmpf oge, %2, %59 : vector<16x8xf32>
    %cst_19 = arith.constant 2.000000e+00 : f32
    %61 = vector.broadcast %cst_19 : f32 to vector<16x8xf32>
    %62 = arith.cmpf olt, %2, %61 : vector<16x8xf32>
    %63 = arith.andi %60, %62 : vector<16x8xi1>
    %64 = arith.extui %63 : vector<16x8xi1> to vector<16x8xi32>
    %65 = arith.sitofp %64 : vector<16x8xi32> to vector<16x8xf32>
    %cst_20 = arith.constant 2.000000e+00 : f32
    %66 = vector.broadcast %cst_20 : f32 to vector<16x8xf32>
    %67 = arith.cmpf oge, %2, %66 : vector<16x8xf32>
    %cst_21 = arith.constant 2.500000e+00 : f32
    %68 = vector.broadcast %cst_21 : f32 to vector<16x8xf32>
    %69 = arith.cmpf olt, %2, %68 : vector<16x8xf32>
    %70 = arith.andi %67, %69 : vector<16x8xi1>
    %71 = arith.extui %70 : vector<16x8xi1> to vector<16x8xi32>
    %72 = arith.sitofp %71 : vector<16x8xi32> to vector<16x8xf32>
    %cst_22 = arith.constant -2.500000e+00 : f32
    %73 = vector.broadcast %cst_22 : f32 to vector<16x8xf32>
    %74 = arith.subf %2, %73 : vector<16x8xf32>
    %75 = arith.mulf %74, %9 : vector<16x8xf32>
    %cst_23 = arith.constant -1.500000e+00 : f32
    %76 = vector.broadcast %cst_23 : f32 to vector<16x8xf32>
    %77 = arith.subf %76, %2 : vector<16x8xf32>
    %78 = arith.mulf %77, %16 : vector<16x8xf32>
    %79 = arith.addf %75, %78 : vector<16x8xf32>
    %cst_24 = arith.constant 2.000000e+00 : f32
    %80 = vector.broadcast %cst_24 : f32 to vector<16x8xf32>
    %81 = arith.mulf %79, %80 : vector<16x8xf32>
    %cst_25 = arith.constant -2.000000e+00 : f32
    %82 = vector.broadcast %cst_25 : f32 to vector<16x8xf32>
    %83 = arith.subf %2, %82 : vector<16x8xf32>
    %84 = arith.mulf %83, %16 : vector<16x8xf32>
    %cst_26 = arith.constant -1.000000e+00 : f32
    %85 = vector.broadcast %cst_26 : f32 to vector<16x8xf32>
    %86 = arith.subf %85, %2 : vector<16x8xf32>
    %87 = arith.mulf %86, %23 : vector<16x8xf32>
    %88 = arith.addf %84, %87 : vector<16x8xf32>
    %cst_27 = arith.constant 2.000000e+00 : f32
    %89 = vector.broadcast %cst_27 : f32 to vector<16x8xf32>
    %90 = arith.mulf %88, %89 : vector<16x8xf32>
    %cst_28 = arith.constant -1.500000e+00 : f32
    %91 = vector.broadcast %cst_28 : f32 to vector<16x8xf32>
    %92 = arith.subf %2, %91 : vector<16x8xf32>
    %93 = arith.mulf %92, %23 : vector<16x8xf32>
    %cst_29 = arith.constant -5.000000e-01 : f32
    %94 = vector.broadcast %cst_29 : f32 to vector<16x8xf32>
    %95 = arith.subf %94, %2 : vector<16x8xf32>
    %96 = arith.mulf %95, %30 : vector<16x8xf32>
    %97 = arith.addf %93, %96 : vector<16x8xf32>
    %cst_30 = arith.constant 2.000000e+00 : f32
    %98 = vector.broadcast %cst_30 : f32 to vector<16x8xf32>
    %99 = arith.mulf %97, %98 : vector<16x8xf32>
    %cst_31 = arith.constant -1.000000e+00 : f32
    %100 = vector.broadcast %cst_31 : f32 to vector<16x8xf32>
    %101 = arith.subf %2, %100 : vector<16x8xf32>
    %102 = arith.mulf %101, %30 : vector<16x8xf32>
    %cst_32 = arith.constant 0.000000e+00 : f32
    %103 = vector.broadcast %cst_32 : f32 to vector<16x8xf32>
    %104 = arith.subf %103, %2 : vector<16x8xf32>
    %105 = arith.mulf %104, %37 : vector<16x8xf32>
    %106 = arith.addf %102, %105 : vector<16x8xf32>
    %cst_33 = arith.constant 2.000000e+00 : f32
    %107 = vector.broadcast %cst_33 : f32 to vector<16x8xf32>
    %108 = arith.mulf %106, %107 : vector<16x8xf32>
    %cst_34 = arith.constant -5.000000e-01 : f32
    %109 = vector.broadcast %cst_34 : f32 to vector<16x8xf32>
    %110 = arith.subf %2, %109 : vector<16x8xf32>
    %111 = arith.mulf %110, %37 : vector<16x8xf32>
    %cst_35 = arith.constant 5.000000e-01 : f32
    %112 = vector.broadcast %cst_35 : f32 to vector<16x8xf32>
    %113 = arith.subf %112, %2 : vector<16x8xf32>
    %114 = arith.mulf %113, %44 : vector<16x8xf32>
    %115 = arith.addf %111, %114 : vector<16x8xf32>
    %cst_36 = arith.constant 2.000000e+00 : f32
    %116 = vector.broadcast %cst_36 : f32 to vector<16x8xf32>
    %117 = arith.mulf %115, %116 : vector<16x8xf32>
    %cst_37 = arith.constant 0.000000e+00 : f32
    %118 = vector.broadcast %cst_37 : f32 to vector<16x8xf32>
    %119 = arith.subf %2, %118 : vector<16x8xf32>
    %120 = arith.mulf %119, %44 : vector<16x8xf32>
    %cst_38 = arith.constant 1.000000e+00 : f32
    %121 = vector.broadcast %cst_38 : f32 to vector<16x8xf32>
    %122 = arith.subf %121, %2 : vector<16x8xf32>
    %123 = arith.mulf %122, %51 : vector<16x8xf32>
    %124 = arith.addf %120, %123 : vector<16x8xf32>
    %cst_39 = arith.constant 2.000000e+00 : f32
    %125 = vector.broadcast %cst_39 : f32 to vector<16x8xf32>
    %126 = arith.mulf %124, %125 : vector<16x8xf32>
    %cst_40 = arith.constant 5.000000e-01 : f32
    %127 = vector.broadcast %cst_40 : f32 to vector<16x8xf32>
    %128 = arith.subf %2, %127 : vector<16x8xf32>
    %129 = arith.mulf %128, %51 : vector<16x8xf32>
    %cst_41 = arith.constant 1.500000e+00 : f32
    %130 = vector.broadcast %cst_41 : f32 to vector<16x8xf32>
    %131 = arith.subf %130, %2 : vector<16x8xf32>
    %132 = arith.mulf %131, %58 : vector<16x8xf32>
    %133 = arith.addf %129, %132 : vector<16x8xf32>
    %cst_42 = arith.constant 2.000000e+00 : f32
    %134 = vector.broadcast %cst_42 : f32 to vector<16x8xf32>
    %135 = arith.mulf %133, %134 : vector<16x8xf32>
    %cst_43 = arith.constant 1.000000e+00 : f32
    %136 = vector.broadcast %cst_43 : f32 to vector<16x8xf32>
    %137 = arith.subf %2, %136 : vector<16x8xf32>
    %138 = arith.mulf %137, %58 : vector<16x8xf32>
    %cst_44 = arith.constant 2.000000e+00 : f32
    %139 = vector.broadcast %cst_44 : f32 to vector<16x8xf32>
    %140 = arith.subf %139, %2 : vector<16x8xf32>
    %141 = arith.mulf %140, %65 : vector<16x8xf32>
    %142 = arith.addf %138, %141 : vector<16x8xf32>
    %cst_45 = arith.constant 2.000000e+00 : f32
    %143 = vector.broadcast %cst_45 : f32 to vector<16x8xf32>
    %144 = arith.mulf %142, %143 : vector<16x8xf32>
    %cst_46 = arith.constant 1.500000e+00 : f32
    %145 = vector.broadcast %cst_46 : f32 to vector<16x8xf32>
    %146 = arith.subf %2, %145 : vector<16x8xf32>
    %147 = arith.mulf %146, %65 : vector<16x8xf32>
    %cst_47 = arith.constant 2.500000e+00 : f32
    %148 = vector.broadcast %cst_47 : f32 to vector<16x8xf32>
    %149 = arith.subf %148, %2 : vector<16x8xf32>
    %150 = arith.mulf %149, %72 : vector<16x8xf32>
    %151 = arith.addf %147, %150 : vector<16x8xf32>
    %cst_48 = arith.constant 2.000000e+00 : f32
    %152 = vector.broadcast %cst_48 : f32 to vector<16x8xf32>
    %153 = arith.mulf %151, %152 : vector<16x8xf32>
    %cst_49 = arith.constant -2.500000e+00 : f32
    %154 = vector.broadcast %cst_49 : f32 to vector<16x8xf32>
    %155 = arith.subf %2, %154 : vector<16x8xf32>
    %156 = arith.mulf %155, %81 : vector<16x8xf32>
    %cst_50 = arith.constant -1.000000e+00 : f32
    %157 = vector.broadcast %cst_50 : f32 to vector<16x8xf32>
    %158 = arith.subf %157, %2 : vector<16x8xf32>
    %159 = arith.mulf %158, %90 : vector<16x8xf32>
    %160 = arith.addf %156, %159 : vector<16x8xf32>
    %cst_51 = arith.constant 1.000000e+00 : f32
    %161 = vector.broadcast %cst_51 : f32 to vector<16x8xf32>
    %162 = arith.mulf %160, %161 : vector<16x8xf32>
    %cst_52 = arith.constant -2.000000e+00 : f32
    %163 = vector.broadcast %cst_52 : f32 to vector<16x8xf32>
    %164 = arith.subf %2, %163 : vector<16x8xf32>
    %165 = arith.mulf %164, %90 : vector<16x8xf32>
    %cst_53 = arith.constant -5.000000e-01 : f32
    %166 = vector.broadcast %cst_53 : f32 to vector<16x8xf32>
    %167 = arith.subf %166, %2 : vector<16x8xf32>
    %168 = arith.mulf %167, %99 : vector<16x8xf32>
    %169 = arith.addf %165, %168 : vector<16x8xf32>
    %cst_54 = arith.constant 1.000000e+00 : f32
    %170 = vector.broadcast %cst_54 : f32 to vector<16x8xf32>
    %171 = arith.mulf %169, %170 : vector<16x8xf32>
    %cst_55 = arith.constant -1.500000e+00 : f32
    %172 = vector.broadcast %cst_55 : f32 to vector<16x8xf32>
    %173 = arith.subf %2, %172 : vector<16x8xf32>
    %174 = arith.mulf %173, %99 : vector<16x8xf32>
    %cst_56 = arith.constant 0.000000e+00 : f32
    %175 = vector.broadcast %cst_56 : f32 to vector<16x8xf32>
    %176 = arith.subf %175, %2 : vector<16x8xf32>
    %177 = arith.mulf %176, %108 : vector<16x8xf32>
    %178 = arith.addf %174, %177 : vector<16x8xf32>
    %cst_57 = arith.constant 1.000000e+00 : f32
    %179 = vector.broadcast %cst_57 : f32 to vector<16x8xf32>
    %180 = arith.mulf %178, %179 : vector<16x8xf32>
    %cst_58 = arith.constant -1.000000e+00 : f32
    %181 = vector.broadcast %cst_58 : f32 to vector<16x8xf32>
    %182 = arith.subf %2, %181 : vector<16x8xf32>
    %183 = arith.mulf %182, %108 : vector<16x8xf32>
    %cst_59 = arith.constant 5.000000e-01 : f32
    %184 = vector.broadcast %cst_59 : f32 to vector<16x8xf32>
    %185 = arith.subf %184, %2 : vector<16x8xf32>
    %186 = arith.mulf %185, %117 : vector<16x8xf32>
    %187 = arith.addf %183, %186 : vector<16x8xf32>
    %cst_60 = arith.constant 1.000000e+00 : f32
    %188 = vector.broadcast %cst_60 : f32 to vector<16x8xf32>
    %189 = arith.mulf %187, %188 : vector<16x8xf32>
    %cst_61 = arith.constant -5.000000e-01 : f32
    %190 = vector.broadcast %cst_61 : f32 to vector<16x8xf32>
    %191 = arith.subf %2, %190 : vector<16x8xf32>
    %192 = arith.mulf %191, %117 : vector<16x8xf32>
    %cst_62 = arith.constant 1.000000e+00 : f32
    %193 = vector.broadcast %cst_62 : f32 to vector<16x8xf32>
    %194 = arith.subf %193, %2 : vector<16x8xf32>
    %195 = arith.mulf %194, %126 : vector<16x8xf32>
    %196 = arith.addf %192, %195 : vector<16x8xf32>
    %cst_63 = arith.constant 1.000000e+00 : f32
    %197 = vector.broadcast %cst_63 : f32 to vector<16x8xf32>
    %198 = arith.mulf %196, %197 : vector<16x8xf32>
    %cst_64 = arith.constant 0.000000e+00 : f32
    %199 = vector.broadcast %cst_64 : f32 to vector<16x8xf32>
    %200 = arith.subf %2, %199 : vector<16x8xf32>
    %201 = arith.mulf %200, %126 : vector<16x8xf32>
    %cst_65 = arith.constant 1.500000e+00 : f32
    %202 = vector.broadcast %cst_65 : f32 to vector<16x8xf32>
    %203 = arith.subf %202, %2 : vector<16x8xf32>
    %204 = arith.mulf %203, %135 : vector<16x8xf32>
    %205 = arith.addf %201, %204 : vector<16x8xf32>
    %cst_66 = arith.constant 1.000000e+00 : f32
    %206 = vector.broadcast %cst_66 : f32 to vector<16x8xf32>
    %207 = arith.mulf %205, %206 : vector<16x8xf32>
    %cst_67 = arith.constant 5.000000e-01 : f32
    %208 = vector.broadcast %cst_67 : f32 to vector<16x8xf32>
    %209 = arith.subf %2, %208 : vector<16x8xf32>
    %210 = arith.mulf %209, %135 : vector<16x8xf32>
    %cst_68 = arith.constant 2.000000e+00 : f32
    %211 = vector.broadcast %cst_68 : f32 to vector<16x8xf32>
    %212 = arith.subf %211, %2 : vector<16x8xf32>
    %213 = arith.mulf %212, %144 : vector<16x8xf32>
    %214 = arith.addf %210, %213 : vector<16x8xf32>
    %cst_69 = arith.constant 1.000000e+00 : f32
    %215 = vector.broadcast %cst_69 : f32 to vector<16x8xf32>
    %216 = arith.mulf %214, %215 : vector<16x8xf32>
    %cst_70 = arith.constant 1.000000e+00 : f32
    %217 = vector.broadcast %cst_70 : f32 to vector<16x8xf32>
    %218 = arith.subf %2, %217 : vector<16x8xf32>
    %219 = arith.mulf %218, %144 : vector<16x8xf32>
    %cst_71 = arith.constant 2.500000e+00 : f32
    %220 = vector.broadcast %cst_71 : f32 to vector<16x8xf32>
    %221 = arith.subf %220, %2 : vector<16x8xf32>
    %222 = arith.mulf %221, %153 : vector<16x8xf32>
    %223 = arith.addf %219, %222 : vector<16x8xf32>
    %cst_72 = arith.constant 1.000000e+00 : f32
    %224 = vector.broadcast %cst_72 : f32 to vector<16x8xf32>
    %225 = arith.mulf %223, %224 : vector<16x8xf32>
    %cst_73 = arith.constant -2.500000e+00 : f32
    %226 = vector.broadcast %cst_73 : f32 to vector<16x8xf32>
    %227 = arith.subf %2, %226 : vector<16x8xf32>
    %228 = arith.mulf %227, %162 : vector<16x8xf32>
    %cst_74 = arith.constant -5.000000e-01 : f32
    %229 = vector.broadcast %cst_74 : f32 to vector<16x8xf32>
    %230 = arith.subf %229, %2 : vector<16x8xf32>
    %231 = arith.mulf %230, %171 : vector<16x8xf32>
    %232 = arith.addf %228, %231 : vector<16x8xf32>
    %cst_75 = arith.constant 0.666666686 : f32
    %233 = vector.broadcast %cst_75 : f32 to vector<16x8xf32>
    %234 = arith.mulf %232, %233 : vector<16x8xf32>
    %cst_76 = arith.constant -2.000000e+00 : f32
    %235 = vector.broadcast %cst_76 : f32 to vector<16x8xf32>
    %236 = arith.subf %2, %235 : vector<16x8xf32>
    %237 = arith.mulf %236, %171 : vector<16x8xf32>
    %cst_77 = arith.constant 0.000000e+00 : f32
    %238 = vector.broadcast %cst_77 : f32 to vector<16x8xf32>
    %239 = arith.subf %238, %2 : vector<16x8xf32>
    %240 = arith.mulf %239, %180 : vector<16x8xf32>
    %241 = arith.addf %237, %240 : vector<16x8xf32>
    %cst_78 = arith.constant 0.666666686 : f32
    %242 = vector.broadcast %cst_78 : f32 to vector<16x8xf32>
    %243 = arith.mulf %241, %242 : vector<16x8xf32>
    %cst_79 = arith.constant -1.500000e+00 : f32
    %244 = vector.broadcast %cst_79 : f32 to vector<16x8xf32>
    %245 = arith.subf %2, %244 : vector<16x8xf32>
    %246 = arith.mulf %245, %180 : vector<16x8xf32>
    %cst_80 = arith.constant 5.000000e-01 : f32
    %247 = vector.broadcast %cst_80 : f32 to vector<16x8xf32>
    %248 = arith.subf %247, %2 : vector<16x8xf32>
    %249 = arith.mulf %248, %189 : vector<16x8xf32>
    %250 = arith.addf %246, %249 : vector<16x8xf32>
    %cst_81 = arith.constant 0.666666686 : f32
    %251 = vector.broadcast %cst_81 : f32 to vector<16x8xf32>
    %252 = arith.mulf %250, %251 : vector<16x8xf32>
    %cst_82 = arith.constant -1.000000e+00 : f32
    %253 = vector.broadcast %cst_82 : f32 to vector<16x8xf32>
    %254 = arith.subf %2, %253 : vector<16x8xf32>
    %255 = arith.mulf %254, %189 : vector<16x8xf32>
    %cst_83 = arith.constant 1.000000e+00 : f32
    %256 = vector.broadcast %cst_83 : f32 to vector<16x8xf32>
    %257 = arith.subf %256, %2 : vector<16x8xf32>
    %258 = arith.mulf %257, %198 : vector<16x8xf32>
    %259 = arith.addf %255, %258 : vector<16x8xf32>
    %cst_84 = arith.constant 0.666666686 : f32
    %260 = vector.broadcast %cst_84 : f32 to vector<16x8xf32>
    %261 = arith.mulf %259, %260 : vector<16x8xf32>
    %cst_85 = arith.constant -5.000000e-01 : f32
    %262 = vector.broadcast %cst_85 : f32 to vector<16x8xf32>
    %263 = arith.subf %2, %262 : vector<16x8xf32>
    %264 = arith.mulf %263, %198 : vector<16x8xf32>
    %cst_86 = arith.constant 1.500000e+00 : f32
    %265 = vector.broadcast %cst_86 : f32 to vector<16x8xf32>
    %266 = arith.subf %265, %2 : vector<16x8xf32>
    %267 = arith.mulf %266, %207 : vector<16x8xf32>
    %268 = arith.addf %264, %267 : vector<16x8xf32>
    %cst_87 = arith.constant 0.666666686 : f32
    %269 = vector.broadcast %cst_87 : f32 to vector<16x8xf32>
    %270 = arith.mulf %268, %269 : vector<16x8xf32>
    %cst_88 = arith.constant 0.000000e+00 : f32
    %271 = vector.broadcast %cst_88 : f32 to vector<16x8xf32>
    %272 = arith.subf %2, %271 : vector<16x8xf32>
    %273 = arith.mulf %272, %207 : vector<16x8xf32>
    %cst_89 = arith.constant 2.000000e+00 : f32
    %274 = vector.broadcast %cst_89 : f32 to vector<16x8xf32>
    %275 = arith.subf %274, %2 : vector<16x8xf32>
    %276 = arith.mulf %275, %216 : vector<16x8xf32>
    %277 = arith.addf %273, %276 : vector<16x8xf32>
    %cst_90 = arith.constant 0.666666686 : f32
    %278 = vector.broadcast %cst_90 : f32 to vector<16x8xf32>
    %279 = arith.mulf %277, %278 : vector<16x8xf32>
    %cst_91 = arith.constant 5.000000e-01 : f32
    %280 = vector.broadcast %cst_91 : f32 to vector<16x8xf32>
    %281 = arith.subf %2, %280 : vector<16x8xf32>
    %282 = arith.mulf %281, %216 : vector<16x8xf32>
    %cst_92 = arith.constant 2.500000e+00 : f32
    %283 = vector.broadcast %cst_92 : f32 to vector<16x8xf32>
    %284 = arith.subf %283, %2 : vector<16x8xf32>
    %285 = arith.mulf %284, %225 : vector<16x8xf32>
    %286 = arith.addf %282, %285 : vector<16x8xf32>
    %cst_93 = arith.constant 0.666666686 : f32
    %287 = vector.broadcast %cst_93 : f32 to vector<16x8xf32>
    %288 = arith.mulf %286, %287 : vector<16x8xf32>
    %289 = arith.negf %2 : vector<16x8xf32>
    %290 = math.exp %289 : vector<16x8xf32>
    %cst_94 = arith.constant 1.000000e+00 : f32
    %291 = vector.broadcast %cst_94 : f32 to vector<16x8xf32>
    %292 = arith.addf %291, %290 : vector<16x8xf32>
    %293 = arith.divf %291, %292 : vector<16x8xf32>
    %294 = arith.mulf %2, %293 : vector<16x8xf32>
    %295 = tpu.concatenate %294, %234, %243, %252, %261, %270, %279, %288 in 1 : vector<16x8xf32>, vector<16x8xf32>, vector<16x8xf32>, vector<16x8xf32>, vector<16x8xf32>, vector<16x8xf32>, vector<16x8xf32>, vector<16x8xf32> -> vector<16x64xf32>
    %296 = arith.truncf %295 : vector<16x64xf32> to vector<16x64xbf16>
    %c0_95 = arith.constant 0 : index
    %c0_96 = arith.constant 0 : index
    %297 = vector.load %arg2[%c0_95, %c0_96] : memref<64x32xbf16, #tpu.memory_space<vmem>>, vector<64x32xbf16>
    %cst_97 = arith.constant dense<0.000000e+00> : vector<16x32xf32>
    %298 = tpu.matmul %296, %297, %cst_97 {dimension_numbers = #tpu.dot_dimension_numbers<[1], [0], [0], [1], [0, 0, 1, 1], [], []>} : vector<16x64xbf16>, vector<64x32xbf16>, vector<16x32xf32> -> vector<16x32xf32>
    %299 = arith.truncf %298 : vector<16x32xf32> to vector<16x32xbf16>
    %cst_98 = arith.constant dense<0.000000e+00> : vector<16x32xf32>
    %300 = tpu.matmul %1, %299, %cst_98 {dimension_numbers = #tpu.dot_dimension_numbers<[1], [0], [0], [1], [0, 0, 1, 1], [], []>} : vector<16x16xbf16>, vector<16x32xbf16>, vector<16x32xf32> -> vector<16x32xf32>
    %c0_99 = arith.constant 0 : index
    %c0_100 = arith.constant 0 : index
    %301 = vector.load %arg3[%c0_99, %c0_100] : memref<1x32xf32, #tpu.memory_space<vmem>>, vector<1x32xf32>
    %302 = vector.broadcast %301 : vector<1x32xf32> to vector<16x32xf32>
    %303 = arith.addf %300, %302 : vector<16x32xf32>
    %304 = arith.negf %303 : vector<16x32xf32>
    %305 = math.exp %304 : vector<16x32xf32>
    %cst_101 = arith.constant 1.000000e+00 : f32
    %306 = vector.broadcast %cst_101 : f32 to vector<16x32xf32>
    %307 = arith.addf %306, %305 : vector<16x32xf32>
    %308 = arith.divf %306, %307 : vector<16x32xf32>
    %309 = arith.mulf %303, %308 : vector<16x32xf32>
    %cst_102 = arith.constant -2.500000e+00 : f32
    %310 = vector.broadcast %cst_102 : f32 to vector<16x32xf32>
    %311 = arith.cmpf oge, %309, %310 : vector<16x32xf32>
    %cst_103 = arith.constant -2.000000e+00 : f32
    %312 = vector.broadcast %cst_103 : f32 to vector<16x32xf32>
    %313 = arith.cmpf olt, %309, %312 : vector<16x32xf32>
    %314 = arith.andi %311, %313 : vector<16x32xi1>
    %315 = arith.extui %314 : vector<16x32xi1> to vector<16x32xi32>
    %316 = arith.sitofp %315 : vector<16x32xi32> to vector<16x32xf32>
    %cst_104 = arith.constant -2.000000e+00 : f32
    %317 = vector.broadcast %cst_104 : f32 to vector<16x32xf32>
    %318 = arith.cmpf oge, %309, %317 : vector<16x32xf32>
    %cst_105 = arith.constant -1.500000e+00 : f32
    %319 = vector.broadcast %cst_105 : f32 to vector<16x32xf32>
    %320 = arith.cmpf olt, %309, %319 : vector<16x32xf32>
    %321 = arith.andi %318, %320 : vector<16x32xi1>
    %322 = arith.extui %321 : vector<16x32xi1> to vector<16x32xi32>
    %323 = arith.sitofp %322 : vector<16x32xi32> to vector<16x32xf32>
    %cst_106 = arith.constant -1.500000e+00 : f32
    %324 = vector.broadcast %cst_106 : f32 to vector<16x32xf32>
    %325 = arith.cmpf oge, %309, %324 : vector<16x32xf32>
    %cst_107 = arith.constant -1.000000e+00 : f32
    %326 = vector.broadcast %cst_107 : f32 to vector<16x32xf32>
    %327 = arith.cmpf olt, %309, %326 : vector<16x32xf32>
    %328 = arith.andi %325, %327 : vector<16x32xi1>
    %329 = arith.extui %328 : vector<16x32xi1> to vector<16x32xi32>
    %330 = arith.sitofp %329 : vector<16x32xi32> to vector<16x32xf32>
    %cst_108 = arith.constant -1.000000e+00 : f32
    %331 = vector.broadcast %cst_108 : f32 to vector<16x32xf32>
    %332 = arith.cmpf oge, %309, %331 : vector<16x32xf32>
    %cst_109 = arith.constant -5.000000e-01 : f32
    %333 = vector.broadcast %cst_109 : f32 to vector<16x32xf32>
    %334 = arith.cmpf olt, %309, %333 : vector<16x32xf32>
    %335 = arith.andi %332, %334 : vector<16x32xi1>
    %336 = arith.extui %335 : vector<16x32xi1> to vector<16x32xi32>
    %337 = arith.sitofp %336 : vector<16x32xi32> to vector<16x32xf32>
    %cst_110 = arith.constant -5.000000e-01 : f32
    %338 = vector.broadcast %cst_110 : f32 to vector<16x32xf32>
    %339 = arith.cmpf oge, %309, %338 : vector<16x32xf32>
    %cst_111 = arith.constant 0.000000e+00 : f32
    %340 = vector.broadcast %cst_111 : f32 to vector<16x32xf32>
    %341 = arith.cmpf olt, %309, %340 : vector<16x32xf32>
    %342 = arith.andi %339, %341 : vector<16x32xi1>
    %343 = arith.extui %342 : vector<16x32xi1> to vector<16x32xi32>
    %344 = arith.sitofp %343 : vector<16x32xi32> to vector<16x32xf32>
    %cst_112 = arith.constant 0.000000e+00 : f32
    %345 = vector.broadcast %cst_112 : f32 to vector<16x32xf32>
    %346 = arith.cmpf oge, %309, %345 : vector<16x32xf32>
    %cst_113 = arith.constant 5.000000e-01 : f32
    %347 = vector.broadcast %cst_113 : f32 to vector<16x32xf32>
    %348 = arith.cmpf olt, %309, %347 : vector<16x32xf32>
    %349 = arith.andi %346, %348 : vector<16x32xi1>
    %350 = arith.extui %349 : vector<16x32xi1> to vector<16x32xi32>
    %351 = arith.sitofp %350 : vector<16x32xi32> to vector<16x32xf32>
    %cst_114 = arith.constant 5.000000e-01 : f32
    %352 = vector.broadcast %cst_114 : f32 to vector<16x32xf32>
    %353 = arith.cmpf oge, %309, %352 : vector<16x32xf32>
    %cst_115 = arith.constant 1.000000e+00 : f32
    %354 = vector.broadcast %cst_115 : f32 to vector<16x32xf32>
    %355 = arith.cmpf olt, %309, %354 : vector<16x32xf32>
    %356 = arith.andi %353, %355 : vector<16x32xi1>
    %357 = arith.extui %356 : vector<16x32xi1> to vector<16x32xi32>
    %358 = arith.sitofp %357 : vector<16x32xi32> to vector<16x32xf32>
    %cst_116 = arith.constant 1.000000e+00 : f32
    %359 = vector.broadcast %cst_116 : f32 to vector<16x32xf32>
    %360 = arith.cmpf oge, %309, %359 : vector<16x32xf32>
    %cst_117 = arith.constant 1.500000e+00 : f32
    %361 = vector.broadcast %cst_117 : f32 to vector<16x32xf32>
    %362 = arith.cmpf olt, %309, %361 : vector<16x32xf32>
    %363 = arith.andi %360, %362 : vector<16x32xi1>
    %364 = arith.extui %363 : vector<16x32xi1> to vector<16x32xi32>
    %365 = arith.sitofp %364 : vector<16x32xi32> to vector<16x32xf32>
    %cst_118 = arith.constant 1.500000e+00 : f32
    %366 = vector.broadcast %cst_118 : f32 to vector<16x32xf32>
    %367 = arith.cmpf oge, %309, %366 : vector<16x32xf32>
    %cst_119 = arith.constant 2.000000e+00 : f32
    %368 = vector.broadcast %cst_119 : f32 to vector<16x32xf32>
    %369 = arith.cmpf olt, %309, %368 : vector<16x32xf32>
    %370 = arith.andi %367, %369 : vector<16x32xi1>
    %371 = arith.extui %370 : vector<16x32xi1> to vector<16x32xi32>
    %372 = arith.sitofp %371 : vector<16x32xi32> to vector<16x32xf32>
    %cst_120 = arith.constant 2.000000e+00 : f32
    %373 = vector.broadcast %cst_120 : f32 to vector<16x32xf32>
    %374 = arith.cmpf oge, %309, %373 : vector<16x32xf32>
    %cst_121 = arith.constant 2.500000e+00 : f32
    %375 = vector.broadcast %cst_121 : f32 to vector<16x32xf32>
    %376 = arith.cmpf olt, %309, %375 : vector<16x32xf32>
    %377 = arith.andi %374, %376 : vector<16x32xi1>
    %378 = arith.extui %377 : vector<16x32xi1> to vector<16x32xi32>
    %379 = arith.sitofp %378 : vector<16x32xi32> to vector<16x32xf32>
    %cst_122 = arith.constant -2.500000e+00 : f32
    %380 = vector.broadcast %cst_122 : f32 to vector<16x32xf32>
    %381 = arith.subf %309, %380 : vector<16x32xf32>
    %382 = arith.mulf %381, %316 : vector<16x32xf32>
    %cst_123 = arith.constant -1.500000e+00 : f32
    %383 = vector.broadcast %cst_123 : f32 to vector<16x32xf32>
    %384 = arith.subf %383, %309 : vector<16x32xf32>
    %385 = arith.mulf %384, %323 : vector<16x32xf32>
    %386 = arith.addf %382, %385 : vector<16x32xf32>
    %cst_124 = arith.constant 2.000000e+00 : f32
    %387 = vector.broadcast %cst_124 : f32 to vector<16x32xf32>
    %388 = arith.mulf %386, %387 : vector<16x32xf32>
    %cst_125 = arith.constant -2.000000e+00 : f32
    %389 = vector.broadcast %cst_125 : f32 to vector<16x32xf32>
    %390 = arith.subf %309, %389 : vector<16x32xf32>
    %391 = arith.mulf %390, %323 : vector<16x32xf32>
    %cst_126 = arith.constant -1.000000e+00 : f32
    %392 = vector.broadcast %cst_126 : f32 to vector<16x32xf32>
    %393 = arith.subf %392, %309 : vector<16x32xf32>
    %394 = arith.mulf %393, %330 : vector<16x32xf32>
    %395 = arith.addf %391, %394 : vector<16x32xf32>
    %cst_127 = arith.constant 2.000000e+00 : f32
    %396 = vector.broadcast %cst_127 : f32 to vector<16x32xf32>
    %397 = arith.mulf %395, %396 : vector<16x32xf32>
    %cst_128 = arith.constant -1.500000e+00 : f32
    %398 = vector.broadcast %cst_128 : f32 to vector<16x32xf32>
    %399 = arith.subf %309, %398 : vector<16x32xf32>
    %400 = arith.mulf %399, %330 : vector<16x32xf32>
    %cst_129 = arith.constant -5.000000e-01 : f32
    %401 = vector.broadcast %cst_129 : f32 to vector<16x32xf32>
    %402 = arith.subf %401, %309 : vector<16x32xf32>
    %403 = arith.mulf %402, %337 : vector<16x32xf32>
    %404 = arith.addf %400, %403 : vector<16x32xf32>
    %cst_130 = arith.constant 2.000000e+00 : f32
    %405 = vector.broadcast %cst_130 : f32 to vector<16x32xf32>
    %406 = arith.mulf %404, %405 : vector<16x32xf32>
    %cst_131 = arith.constant -1.000000e+00 : f32
    %407 = vector.broadcast %cst_131 : f32 to vector<16x32xf32>
    %408 = arith.subf %309, %407 : vector<16x32xf32>
    %409 = arith.mulf %408, %337 : vector<16x32xf32>
    %cst_132 = arith.constant 0.000000e+00 : f32
    %410 = vector.broadcast %cst_132 : f32 to vector<16x32xf32>
    %411 = arith.subf %410, %309 : vector<16x32xf32>
    %412 = arith.mulf %411, %344 : vector<16x32xf32>
    %413 = arith.addf %409, %412 : vector<16x32xf32>
    %cst_133 = arith.constant 2.000000e+00 : f32
    %414 = vector.broadcast %cst_133 : f32 to vector<16x32xf32>
    %415 = arith.mulf %413, %414 : vector<16x32xf32>
    %cst_134 = arith.constant -5.000000e-01 : f32
    %416 = vector.broadcast %cst_134 : f32 to vector<16x32xf32>
    %417 = arith.subf %309, %416 : vector<16x32xf32>
    %418 = arith.mulf %417, %344 : vector<16x32xf32>
    %cst_135 = arith.constant 5.000000e-01 : f32
    %419 = vector.broadcast %cst_135 : f32 to vector<16x32xf32>
    %420 = arith.subf %419, %309 : vector<16x32xf32>
    %421 = arith.mulf %420, %351 : vector<16x32xf32>
    %422 = arith.addf %418, %421 : vector<16x32xf32>
    %cst_136 = arith.constant 2.000000e+00 : f32
    %423 = vector.broadcast %cst_136 : f32 to vector<16x32xf32>
    %424 = arith.mulf %422, %423 : vector<16x32xf32>
    %cst_137 = arith.constant 0.000000e+00 : f32
    %425 = vector.broadcast %cst_137 : f32 to vector<16x32xf32>
    %426 = arith.subf %309, %425 : vector<16x32xf32>
    %427 = arith.mulf %426, %351 : vector<16x32xf32>
    %cst_138 = arith.constant 1.000000e+00 : f32
    %428 = vector.broadcast %cst_138 : f32 to vector<16x32xf32>
    %429 = arith.subf %428, %309 : vector<16x32xf32>
    %430 = arith.mulf %429, %358 : vector<16x32xf32>
    %431 = arith.addf %427, %430 : vector<16x32xf32>
    %cst_139 = arith.constant 2.000000e+00 : f32
    %432 = vector.broadcast %cst_139 : f32 to vector<16x32xf32>
    %433 = arith.mulf %431, %432 : vector<16x32xf32>
    %cst_140 = arith.constant 5.000000e-01 : f32
    %434 = vector.broadcast %cst_140 : f32 to vector<16x32xf32>
    %435 = arith.subf %309, %434 : vector<16x32xf32>
    %436 = arith.mulf %435, %358 : vector<16x32xf32>
    %cst_141 = arith.constant 1.500000e+00 : f32
    %437 = vector.broadcast %cst_141 : f32 to vector<16x32xf32>
    %438 = arith.subf %437, %309 : vector<16x32xf32>
    %439 = arith.mulf %438, %365 : vector<16x32xf32>
    %440 = arith.addf %436, %439 : vector<16x32xf32>
    %cst_142 = arith.constant 2.000000e+00 : f32
    %441 = vector.broadcast %cst_142 : f32 to vector<16x32xf32>
    %442 = arith.mulf %440, %441 : vector<16x32xf32>
    %cst_143 = arith.constant 1.000000e+00 : f32
    %443 = vector.broadcast %cst_143 : f32 to vector<16x32xf32>
    %444 = arith.subf %309, %443 : vector<16x32xf32>
    %445 = arith.mulf %444, %365 : vector<16x32xf32>
    %cst_144 = arith.constant 2.000000e+00 : f32
    %446 = vector.broadcast %cst_144 : f32 to vector<16x32xf32>
    %447 = arith.subf %446, %309 : vector<16x32xf32>
    %448 = arith.mulf %447, %372 : vector<16x32xf32>
    %449 = arith.addf %445, %448 : vector<16x32xf32>
    %cst_145 = arith.constant 2.000000e+00 : f32
    %450 = vector.broadcast %cst_145 : f32 to vector<16x32xf32>
    %451 = arith.mulf %449, %450 : vector<16x32xf32>
    %cst_146 = arith.constant 1.500000e+00 : f32
    %452 = vector.broadcast %cst_146 : f32 to vector<16x32xf32>
    %453 = arith.subf %309, %452 : vector<16x32xf32>
    %454 = arith.mulf %453, %372 : vector<16x32xf32>
    %cst_147 = arith.constant 2.500000e+00 : f32
    %455 = vector.broadcast %cst_147 : f32 to vector<16x32xf32>
    %456 = arith.subf %455, %309 : vector<16x32xf32>
    %457 = arith.mulf %456, %379 : vector<16x32xf32>
    %458 = arith.addf %454, %457 : vector<16x32xf32>
    %cst_148 = arith.constant 2.000000e+00 : f32
    %459 = vector.broadcast %cst_148 : f32 to vector<16x32xf32>
    %460 = arith.mulf %458, %459 : vector<16x32xf32>
    %cst_149 = arith.constant -2.500000e+00 : f32
    %461 = vector.broadcast %cst_149 : f32 to vector<16x32xf32>
    %462 = arith.subf %309, %461 : vector<16x32xf32>
    %463 = arith.mulf %462, %388 : vector<16x32xf32>
    %cst_150 = arith.constant -1.000000e+00 : f32
    %464 = vector.broadcast %cst_150 : f32 to vector<16x32xf32>
    %465 = arith.subf %464, %309 : vector<16x32xf32>
    %466 = arith.mulf %465, %397 : vector<16x32xf32>
    %467 = arith.addf %463, %466 : vector<16x32xf32>
    %cst_151 = arith.constant 1.000000e+00 : f32
    %468 = vector.broadcast %cst_151 : f32 to vector<16x32xf32>
    %469 = arith.mulf %467, %468 : vector<16x32xf32>
    %cst_152 = arith.constant -2.000000e+00 : f32
    %470 = vector.broadcast %cst_152 : f32 to vector<16x32xf32>
    %471 = arith.subf %309, %470 : vector<16x32xf32>
    %472 = arith.mulf %471, %397 : vector<16x32xf32>
    %cst_153 = arith.constant -5.000000e-01 : f32
    %473 = vector.broadcast %cst_153 : f32 to vector<16x32xf32>
    %474 = arith.subf %473, %309 : vector<16x32xf32>
    %475 = arith.mulf %474, %406 : vector<16x32xf32>
    %476 = arith.addf %472, %475 : vector<16x32xf32>
    %cst_154 = arith.constant 1.000000e+00 : f32
    %477 = vector.broadcast %cst_154 : f32 to vector<16x32xf32>
    %478 = arith.mulf %476, %477 : vector<16x32xf32>
    %cst_155 = arith.constant -1.500000e+00 : f32
    %479 = vector.broadcast %cst_155 : f32 to vector<16x32xf32>
    %480 = arith.subf %309, %479 : vector<16x32xf32>
    %481 = arith.mulf %480, %406 : vector<16x32xf32>
    %cst_156 = arith.constant 0.000000e+00 : f32
    %482 = vector.broadcast %cst_156 : f32 to vector<16x32xf32>
    %483 = arith.subf %482, %309 : vector<16x32xf32>
    %484 = arith.mulf %483, %415 : vector<16x32xf32>
    %485 = arith.addf %481, %484 : vector<16x32xf32>
    %cst_157 = arith.constant 1.000000e+00 : f32
    %486 = vector.broadcast %cst_157 : f32 to vector<16x32xf32>
    %487 = arith.mulf %485, %486 : vector<16x32xf32>
    %cst_158 = arith.constant -1.000000e+00 : f32
    %488 = vector.broadcast %cst_158 : f32 to vector<16x32xf32>
    %489 = arith.subf %309, %488 : vector<16x32xf32>
    %490 = arith.mulf %489, %415 : vector<16x32xf32>
    %cst_159 = arith.constant 5.000000e-01 : f32
    %491 = vector.broadcast %cst_159 : f32 to vector<16x32xf32>
    %492 = arith.subf %491, %309 : vector<16x32xf32>
    %493 = arith.mulf %492, %424 : vector<16x32xf32>
    %494 = arith.addf %490, %493 : vector<16x32xf32>
    %cst_160 = arith.constant 1.000000e+00 : f32
    %495 = vector.broadcast %cst_160 : f32 to vector<16x32xf32>
    %496 = arith.mulf %494, %495 : vector<16x32xf32>
    %cst_161 = arith.constant -5.000000e-01 : f32
    %497 = vector.broadcast %cst_161 : f32 to vector<16x32xf32>
    %498 = arith.subf %309, %497 : vector<16x32xf32>
    %499 = arith.mulf %498, %424 : vector<16x32xf32>
    %cst_162 = arith.constant 1.000000e+00 : f32
    %500 = vector.broadcast %cst_162 : f32 to vector<16x32xf32>
    %501 = arith.subf %500, %309 : vector<16x32xf32>
    %502 = arith.mulf %501, %433 : vector<16x32xf32>
    %503 = arith.addf %499, %502 : vector<16x32xf32>
    %cst_163 = arith.constant 1.000000e+00 : f32
    %504 = vector.broadcast %cst_163 : f32 to vector<16x32xf32>
    %505 = arith.mulf %503, %504 : vector<16x32xf32>
    %cst_164 = arith.constant 0.000000e+00 : f32
    %506 = vector.broadcast %cst_164 : f32 to vector<16x32xf32>
    %507 = arith.subf %309, %506 : vector<16x32xf32>
    %508 = arith.mulf %507, %433 : vector<16x32xf32>
    %cst_165 = arith.constant 1.500000e+00 : f32
    %509 = vector.broadcast %cst_165 : f32 to vector<16x32xf32>
    %510 = arith.subf %509, %309 : vector<16x32xf32>
    %511 = arith.mulf %510, %442 : vector<16x32xf32>
    %512 = arith.addf %508, %511 : vector<16x32xf32>
    %cst_166 = arith.constant 1.000000e+00 : f32
    %513 = vector.broadcast %cst_166 : f32 to vector<16x32xf32>
    %514 = arith.mulf %512, %513 : vector<16x32xf32>
    %cst_167 = arith.constant 5.000000e-01 : f32
    %515 = vector.broadcast %cst_167 : f32 to vector<16x32xf32>
    %516 = arith.subf %309, %515 : vector<16x32xf32>
    %517 = arith.mulf %516, %442 : vector<16x32xf32>
    %cst_168 = arith.constant 2.000000e+00 : f32
    %518 = vector.broadcast %cst_168 : f32 to vector<16x32xf32>
    %519 = arith.subf %518, %309 : vector<16x32xf32>
    %520 = arith.mulf %519, %451 : vector<16x32xf32>
    %521 = arith.addf %517, %520 : vector<16x32xf32>
    %cst_169 = arith.constant 1.000000e+00 : f32
    %522 = vector.broadcast %cst_169 : f32 to vector<16x32xf32>
    %523 = arith.mulf %521, %522 : vector<16x32xf32>
    %cst_170 = arith.constant 1.000000e+00 : f32
    %524 = vector.broadcast %cst_170 : f32 to vector<16x32xf32>
    %525 = arith.subf %309, %524 : vector<16x32xf32>
    %526 = arith.mulf %525, %451 : vector<16x32xf32>
    %cst_171 = arith.constant 2.500000e+00 : f32
    %527 = vector.broadcast %cst_171 : f32 to vector<16x32xf32>
    %528 = arith.subf %527, %309 : vector<16x32xf32>
    %529 = arith.mulf %528, %460 : vector<16x32xf32>
    %530 = arith.addf %526, %529 : vector<16x32xf32>
    %cst_172 = arith.constant 1.000000e+00 : f32
    %531 = vector.broadcast %cst_172 : f32 to vector<16x32xf32>
    %532 = arith.mulf %530, %531 : vector<16x32xf32>
    %cst_173 = arith.constant -2.500000e+00 : f32
    %533 = vector.broadcast %cst_173 : f32 to vector<16x32xf32>
    %534 = arith.subf %309, %533 : vector<16x32xf32>
    %535 = arith.mulf %534, %469 : vector<16x32xf32>
    %cst_174 = arith.constant -5.000000e-01 : f32
    %536 = vector.broadcast %cst_174 : f32 to vector<16x32xf32>
    %537 = arith.subf %536, %309 : vector<16x32xf32>
    %538 = arith.mulf %537, %478 : vector<16x32xf32>
    %539 = arith.addf %535, %538 : vector<16x32xf32>
    %cst_175 = arith.constant 0.666666686 : f32
    %540 = vector.broadcast %cst_175 : f32 to vector<16x32xf32>
    %541 = arith.mulf %539, %540 : vector<16x32xf32>
    %cst_176 = arith.constant -2.000000e+00 : f32
    %542 = vector.broadcast %cst_176 : f32 to vector<16x32xf32>
    %543 = arith.subf %309, %542 : vector<16x32xf32>
    %544 = arith.mulf %543, %478 : vector<16x32xf32>
    %cst_177 = arith.constant 0.000000e+00 : f32
    %545 = vector.broadcast %cst_177 : f32 to vector<16x32xf32>
    %546 = arith.subf %545, %309 : vector<16x32xf32>
    %547 = arith.mulf %546, %487 : vector<16x32xf32>
    %548 = arith.addf %544, %547 : vector<16x32xf32>
    %cst_178 = arith.constant 0.666666686 : f32
    %549 = vector.broadcast %cst_178 : f32 to vector<16x32xf32>
    %550 = arith.mulf %548, %549 : vector<16x32xf32>
    %cst_179 = arith.constant -1.500000e+00 : f32
    %551 = vector.broadcast %cst_179 : f32 to vector<16x32xf32>
    %552 = arith.subf %309, %551 : vector<16x32xf32>
    %553 = arith.mulf %552, %487 : vector<16x32xf32>
    %cst_180 = arith.constant 5.000000e-01 : f32
    %554 = vector.broadcast %cst_180 : f32 to vector<16x32xf32>
    %555 = arith.subf %554, %309 : vector<16x32xf32>
    %556 = arith.mulf %555, %496 : vector<16x32xf32>
    %557 = arith.addf %553, %556 : vector<16x32xf32>
    %cst_181 = arith.constant 0.666666686 : f32
    %558 = vector.broadcast %cst_181 : f32 to vector<16x32xf32>
    %559 = arith.mulf %557, %558 : vector<16x32xf32>
    %cst_182 = arith.constant -1.000000e+00 : f32
    %560 = vector.broadcast %cst_182 : f32 to vector<16x32xf32>
    %561 = arith.subf %309, %560 : vector<16x32xf32>
    %562 = arith.mulf %561, %496 : vector<16x32xf32>
    %cst_183 = arith.constant 1.000000e+00 : f32
    %563 = vector.broadcast %cst_183 : f32 to vector<16x32xf32>
    %564 = arith.subf %563, %309 : vector<16x32xf32>
    %565 = arith.mulf %564, %505 : vector<16x32xf32>
    %566 = arith.addf %562, %565 : vector<16x32xf32>
    %cst_184 = arith.constant 0.666666686 : f32
    %567 = vector.broadcast %cst_184 : f32 to vector<16x32xf32>
    %568 = arith.mulf %566, %567 : vector<16x32xf32>
    %cst_185 = arith.constant -5.000000e-01 : f32
    %569 = vector.broadcast %cst_185 : f32 to vector<16x32xf32>
    %570 = arith.subf %309, %569 : vector<16x32xf32>
    %571 = arith.mulf %570, %505 : vector<16x32xf32>
    %cst_186 = arith.constant 1.500000e+00 : f32
    %572 = vector.broadcast %cst_186 : f32 to vector<16x32xf32>
    %573 = arith.subf %572, %309 : vector<16x32xf32>
    %574 = arith.mulf %573, %514 : vector<16x32xf32>
    %575 = arith.addf %571, %574 : vector<16x32xf32>
    %cst_187 = arith.constant 0.666666686 : f32
    %576 = vector.broadcast %cst_187 : f32 to vector<16x32xf32>
    %577 = arith.mulf %575, %576 : vector<16x32xf32>
    %cst_188 = arith.constant 0.000000e+00 : f32
    %578 = vector.broadcast %cst_188 : f32 to vector<16x32xf32>
    %579 = arith.subf %309, %578 : vector<16x32xf32>
    %580 = arith.mulf %579, %514 : vector<16x32xf32>
    %cst_189 = arith.constant 2.000000e+00 : f32
    %581 = vector.broadcast %cst_189 : f32 to vector<16x32xf32>
    %582 = arith.subf %581, %309 : vector<16x32xf32>
    %583 = arith.mulf %582, %523 : vector<16x32xf32>
    %584 = arith.addf %580, %583 : vector<16x32xf32>
    %cst_190 = arith.constant 0.666666686 : f32
    %585 = vector.broadcast %cst_190 : f32 to vector<16x32xf32>
    %586 = arith.mulf %584, %585 : vector<16x32xf32>
    %cst_191 = arith.constant 5.000000e-01 : f32
    %587 = vector.broadcast %cst_191 : f32 to vector<16x32xf32>
    %588 = arith.subf %309, %587 : vector<16x32xf32>
    %589 = arith.mulf %588, %523 : vector<16x32xf32>
    %cst_192 = arith.constant 2.500000e+00 : f32
    %590 = vector.broadcast %cst_192 : f32 to vector<16x32xf32>
    %591 = arith.subf %590, %309 : vector<16x32xf32>
    %592 = arith.mulf %591, %532 : vector<16x32xf32>
    %593 = arith.addf %589, %592 : vector<16x32xf32>
    %cst_193 = arith.constant 0.666666686 : f32
    %594 = vector.broadcast %cst_193 : f32 to vector<16x32xf32>
    %595 = arith.mulf %593, %594 : vector<16x32xf32>
    %596 = arith.negf %309 : vector<16x32xf32>
    %597 = math.exp %596 : vector<16x32xf32>
    %cst_194 = arith.constant 1.000000e+00 : f32
    %598 = vector.broadcast %cst_194 : f32 to vector<16x32xf32>
    %599 = arith.addf %598, %597 : vector<16x32xf32>
    %600 = arith.divf %598, %599 : vector<16x32xf32>
    %601 = arith.mulf %309, %600 : vector<16x32xf32>
    %602 = tpu.concatenate %601, %541, %550, %559, %568, %577, %586, %595 in 1 : vector<16x32xf32>, vector<16x32xf32>, vector<16x32xf32>, vector<16x32xf32>, vector<16x32xf32>, vector<16x32xf32>, vector<16x32xf32>, vector<16x32xf32> -> vector<16x256xf32>
    %603 = arith.truncf %602 : vector<16x256xf32> to vector<16x256xbf16>
    %c0_195 = arith.constant 0 : index
    %c0_196 = arith.constant 0 : index
    %604 = vector.load %arg4[%c0_195, %c0_196] : memref<256x32xbf16, #tpu.memory_space<vmem>>, vector<256x32xbf16>
    %cst_197 = arith.constant dense<0.000000e+00> : vector<16x32xf32>
    %605 = tpu.matmul %603, %604, %cst_197 {dimension_numbers = #tpu.dot_dimension_numbers<[1], [0], [0], [1], [0, 0, 1, 1], [], []>} : vector<16x256xbf16>, vector<256x32xbf16>, vector<16x32xf32> -> vector<16x32xf32>
    %606 = arith.truncf %605 : vector<16x32xf32> to vector<16x32xbf16>
    %cst_198 = arith.constant dense<0.000000e+00> : vector<16x32xf32>
    %607 = tpu.matmul %1, %606, %cst_198 {dimension_numbers = #tpu.dot_dimension_numbers<[1], [0], [0], [1], [0, 0, 1, 1], [], []>} : vector<16x16xbf16>, vector<16x32xbf16>, vector<16x32xf32> -> vector<16x32xf32>
    %c0_199 = arith.constant 0 : index
    %c0_200 = arith.constant 0 : index
    %608 = vector.load %arg5[%c0_199, %c0_200] : memref<1x32xf32, #tpu.memory_space<vmem>>, vector<1x32xf32>
    %609 = vector.broadcast %608 : vector<1x32xf32> to vector<16x32xf32>
    %610 = arith.addf %607, %609 : vector<16x32xf32>
    %611 = arith.negf %610 : vector<16x32xf32>
    %612 = math.exp %611 : vector<16x32xf32>
    %cst_201 = arith.constant 1.000000e+00 : f32
    %613 = vector.broadcast %cst_201 : f32 to vector<16x32xf32>
    %614 = arith.addf %613, %612 : vector<16x32xf32>
    %615 = arith.divf %613, %614 : vector<16x32xf32>
    %616 = arith.mulf %610, %615 : vector<16x32xf32>
    %cst_202 = arith.constant -2.500000e+00 : f32
    %617 = vector.broadcast %cst_202 : f32 to vector<16x32xf32>
    %618 = arith.cmpf oge, %616, %617 : vector<16x32xf32>
    %cst_203 = arith.constant -2.000000e+00 : f32
    %619 = vector.broadcast %cst_203 : f32 to vector<16x32xf32>
    %620 = arith.cmpf olt, %616, %619 : vector<16x32xf32>
    %621 = arith.andi %618, %620 : vector<16x32xi1>
    %622 = arith.extui %621 : vector<16x32xi1> to vector<16x32xi32>
    %623 = arith.sitofp %622 : vector<16x32xi32> to vector<16x32xf32>
    %cst_204 = arith.constant -2.000000e+00 : f32
    %624 = vector.broadcast %cst_204 : f32 to vector<16x32xf32>
    %625 = arith.cmpf oge, %616, %624 : vector<16x32xf32>
    %cst_205 = arith.constant -1.500000e+00 : f32
    %626 = vector.broadcast %cst_205 : f32 to vector<16x32xf32>
    %627 = arith.cmpf olt, %616, %626 : vector<16x32xf32>
    %628 = arith.andi %625, %627 : vector<16x32xi1>
    %629 = arith.extui %628 : vector<16x32xi1> to vector<16x32xi32>
    %630 = arith.sitofp %629 : vector<16x32xi32> to vector<16x32xf32>
    %cst_206 = arith.constant -1.500000e+00 : f32
    %631 = vector.broadcast %cst_206 : f32 to vector<16x32xf32>
    %632 = arith.cmpf oge, %616, %631 : vector<16x32xf32>
    %cst_207 = arith.constant -1.000000e+00 : f32
    %633 = vector.broadcast %cst_207 : f32 to vector<16x32xf32>
    %634 = arith.cmpf olt, %616, %633 : vector<16x32xf32>
    %635 = arith.andi %632, %634 : vector<16x32xi1>
    %636 = arith.extui %635 : vector<16x32xi1> to vector<16x32xi32>
    %637 = arith.sitofp %636 : vector<16x32xi32> to vector<16x32xf32>
    %cst_208 = arith.constant -1.000000e+00 : f32
    %638 = vector.broadcast %cst_208 : f32 to vector<16x32xf32>
    %639 = arith.cmpf oge, %616, %638 : vector<16x32xf32>
    %cst_209 = arith.constant -5.000000e-01 : f32
    %640 = vector.broadcast %cst_209 : f32 to vector<16x32xf32>
    %641 = arith.cmpf olt, %616, %640 : vector<16x32xf32>
    %642 = arith.andi %639, %641 : vector<16x32xi1>
    %643 = arith.extui %642 : vector<16x32xi1> to vector<16x32xi32>
    %644 = arith.sitofp %643 : vector<16x32xi32> to vector<16x32xf32>
    %cst_210 = arith.constant -5.000000e-01 : f32
    %645 = vector.broadcast %cst_210 : f32 to vector<16x32xf32>
    %646 = arith.cmpf oge, %616, %645 : vector<16x32xf32>
    %cst_211 = arith.constant 0.000000e+00 : f32
    %647 = vector.broadcast %cst_211 : f32 to vector<16x32xf32>
    %648 = arith.cmpf olt, %616, %647 : vector<16x32xf32>
    %649 = arith.andi %646, %648 : vector<16x32xi1>
    %650 = arith.extui %649 : vector<16x32xi1> to vector<16x32xi32>
    %651 = arith.sitofp %650 : vector<16x32xi32> to vector<16x32xf32>
    %cst_212 = arith.constant 0.000000e+00 : f32
    %652 = vector.broadcast %cst_212 : f32 to vector<16x32xf32>
    %653 = arith.cmpf oge, %616, %652 : vector<16x32xf32>
    %cst_213 = arith.constant 5.000000e-01 : f32
    %654 = vector.broadcast %cst_213 : f32 to vector<16x32xf32>
    %655 = arith.cmpf olt, %616, %654 : vector<16x32xf32>
    %656 = arith.andi %653, %655 : vector<16x32xi1>
    %657 = arith.extui %656 : vector<16x32xi1> to vector<16x32xi32>
    %658 = arith.sitofp %657 : vector<16x32xi32> to vector<16x32xf32>
    %cst_214 = arith.constant 5.000000e-01 : f32
    %659 = vector.broadcast %cst_214 : f32 to vector<16x32xf32>
    %660 = arith.cmpf oge, %616, %659 : vector<16x32xf32>
    %cst_215 = arith.constant 1.000000e+00 : f32
    %661 = vector.broadcast %cst_215 : f32 to vector<16x32xf32>
    %662 = arith.cmpf olt, %616, %661 : vector<16x32xf32>
    %663 = arith.andi %660, %662 : vector<16x32xi1>
    %664 = arith.extui %663 : vector<16x32xi1> to vector<16x32xi32>
    %665 = arith.sitofp %664 : vector<16x32xi32> to vector<16x32xf32>
    %cst_216 = arith.constant 1.000000e+00 : f32
    %666 = vector.broadcast %cst_216 : f32 to vector<16x32xf32>
    %667 = arith.cmpf oge, %616, %666 : vector<16x32xf32>
    %cst_217 = arith.constant 1.500000e+00 : f32
    %668 = vector.broadcast %cst_217 : f32 to vector<16x32xf32>
    %669 = arith.cmpf olt, %616, %668 : vector<16x32xf32>
    %670 = arith.andi %667, %669 : vector<16x32xi1>
    %671 = arith.extui %670 : vector<16x32xi1> to vector<16x32xi32>
    %672 = arith.sitofp %671 : vector<16x32xi32> to vector<16x32xf32>
    %cst_218 = arith.constant 1.500000e+00 : f32
    %673 = vector.broadcast %cst_218 : f32 to vector<16x32xf32>
    %674 = arith.cmpf oge, %616, %673 : vector<16x32xf32>
    %cst_219 = arith.constant 2.000000e+00 : f32
    %675 = vector.broadcast %cst_219 : f32 to vector<16x32xf32>
    %676 = arith.cmpf olt, %616, %675 : vector<16x32xf32>
    %677 = arith.andi %674, %676 : vector<16x32xi1>
    %678 = arith.extui %677 : vector<16x32xi1> to vector<16x32xi32>
    %679 = arith.sitofp %678 : vector<16x32xi32> to vector<16x32xf32>
    %cst_220 = arith.constant 2.000000e+00 : f32
    %680 = vector.broadcast %cst_220 : f32 to vector<16x32xf32>
    %681 = arith.cmpf oge, %616, %680 : vector<16x32xf32>
    %cst_221 = arith.constant 2.500000e+00 : f32
    %682 = vector.broadcast %cst_221 : f32 to vector<16x32xf32>
    %683 = arith.cmpf olt, %616, %682 : vector<16x32xf32>
    %684 = arith.andi %681, %683 : vector<16x32xi1>
    %685 = arith.extui %684 : vector<16x32xi1> to vector<16x32xi32>
    %686 = arith.sitofp %685 : vector<16x32xi32> to vector<16x32xf32>
    %cst_222 = arith.constant -2.500000e+00 : f32
    %687 = vector.broadcast %cst_222 : f32 to vector<16x32xf32>
    %688 = arith.subf %616, %687 : vector<16x32xf32>
    %689 = arith.mulf %688, %623 : vector<16x32xf32>
    %cst_223 = arith.constant -1.500000e+00 : f32
    %690 = vector.broadcast %cst_223 : f32 to vector<16x32xf32>
    %691 = arith.subf %690, %616 : vector<16x32xf32>
    %692 = arith.mulf %691, %630 : vector<16x32xf32>
    %693 = arith.addf %689, %692 : vector<16x32xf32>
    %cst_224 = arith.constant 2.000000e+00 : f32
    %694 = vector.broadcast %cst_224 : f32 to vector<16x32xf32>
    %695 = arith.mulf %693, %694 : vector<16x32xf32>
    %cst_225 = arith.constant -2.000000e+00 : f32
    %696 = vector.broadcast %cst_225 : f32 to vector<16x32xf32>
    %697 = arith.subf %616, %696 : vector<16x32xf32>
    %698 = arith.mulf %697, %630 : vector<16x32xf32>
    %cst_226 = arith.constant -1.000000e+00 : f32
    %699 = vector.broadcast %cst_226 : f32 to vector<16x32xf32>
    %700 = arith.subf %699, %616 : vector<16x32xf32>
    %701 = arith.mulf %700, %637 : vector<16x32xf32>
    %702 = arith.addf %698, %701 : vector<16x32xf32>
    %cst_227 = arith.constant 2.000000e+00 : f32
    %703 = vector.broadcast %cst_227 : f32 to vector<16x32xf32>
    %704 = arith.mulf %702, %703 : vector<16x32xf32>
    %cst_228 = arith.constant -1.500000e+00 : f32
    %705 = vector.broadcast %cst_228 : f32 to vector<16x32xf32>
    %706 = arith.subf %616, %705 : vector<16x32xf32>
    %707 = arith.mulf %706, %637 : vector<16x32xf32>
    %cst_229 = arith.constant -5.000000e-01 : f32
    %708 = vector.broadcast %cst_229 : f32 to vector<16x32xf32>
    %709 = arith.subf %708, %616 : vector<16x32xf32>
    %710 = arith.mulf %709, %644 : vector<16x32xf32>
    %711 = arith.addf %707, %710 : vector<16x32xf32>
    %cst_230 = arith.constant 2.000000e+00 : f32
    %712 = vector.broadcast %cst_230 : f32 to vector<16x32xf32>
    %713 = arith.mulf %711, %712 : vector<16x32xf32>
    %cst_231 = arith.constant -1.000000e+00 : f32
    %714 = vector.broadcast %cst_231 : f32 to vector<16x32xf32>
    %715 = arith.subf %616, %714 : vector<16x32xf32>
    %716 = arith.mulf %715, %644 : vector<16x32xf32>
    %cst_232 = arith.constant 0.000000e+00 : f32
    %717 = vector.broadcast %cst_232 : f32 to vector<16x32xf32>
    %718 = arith.subf %717, %616 : vector<16x32xf32>
    %719 = arith.mulf %718, %651 : vector<16x32xf32>
    %720 = arith.addf %716, %719 : vector<16x32xf32>
    %cst_233 = arith.constant 2.000000e+00 : f32
    %721 = vector.broadcast %cst_233 : f32 to vector<16x32xf32>
    %722 = arith.mulf %720, %721 : vector<16x32xf32>
    %cst_234 = arith.constant -5.000000e-01 : f32
    %723 = vector.broadcast %cst_234 : f32 to vector<16x32xf32>
    %724 = arith.subf %616, %723 : vector<16x32xf32>
    %725 = arith.mulf %724, %651 : vector<16x32xf32>
    %cst_235 = arith.constant 5.000000e-01 : f32
    %726 = vector.broadcast %cst_235 : f32 to vector<16x32xf32>
    %727 = arith.subf %726, %616 : vector<16x32xf32>
    %728 = arith.mulf %727, %658 : vector<16x32xf32>
    %729 = arith.addf %725, %728 : vector<16x32xf32>
    %cst_236 = arith.constant 2.000000e+00 : f32
    %730 = vector.broadcast %cst_236 : f32 to vector<16x32xf32>
    %731 = arith.mulf %729, %730 : vector<16x32xf32>
    %cst_237 = arith.constant 0.000000e+00 : f32
    %732 = vector.broadcast %cst_237 : f32 to vector<16x32xf32>
    %733 = arith.subf %616, %732 : vector<16x32xf32>
    %734 = arith.mulf %733, %658 : vector<16x32xf32>
    %cst_238 = arith.constant 1.000000e+00 : f32
    %735 = vector.broadcast %cst_238 : f32 to vector<16x32xf32>
    %736 = arith.subf %735, %616 : vector<16x32xf32>
    %737 = arith.mulf %736, %665 : vector<16x32xf32>
    %738 = arith.addf %734, %737 : vector<16x32xf32>
    %cst_239 = arith.constant 2.000000e+00 : f32
    %739 = vector.broadcast %cst_239 : f32 to vector<16x32xf32>
    %740 = arith.mulf %738, %739 : vector<16x32xf32>
    %cst_240 = arith.constant 5.000000e-01 : f32
    %741 = vector.broadcast %cst_240 : f32 to vector<16x32xf32>
    %742 = arith.subf %616, %741 : vector<16x32xf32>
    %743 = arith.mulf %742, %665 : vector<16x32xf32>
    %cst_241 = arith.constant 1.500000e+00 : f32
    %744 = vector.broadcast %cst_241 : f32 to vector<16x32xf32>
    %745 = arith.subf %744, %616 : vector<16x32xf32>
    %746 = arith.mulf %745, %672 : vector<16x32xf32>
    %747 = arith.addf %743, %746 : vector<16x32xf32>
    %cst_242 = arith.constant 2.000000e+00 : f32
    %748 = vector.broadcast %cst_242 : f32 to vector<16x32xf32>
    %749 = arith.mulf %747, %748 : vector<16x32xf32>
    %cst_243 = arith.constant 1.000000e+00 : f32
    %750 = vector.broadcast %cst_243 : f32 to vector<16x32xf32>
    %751 = arith.subf %616, %750 : vector<16x32xf32>
    %752 = arith.mulf %751, %672 : vector<16x32xf32>
    %cst_244 = arith.constant 2.000000e+00 : f32
    %753 = vector.broadcast %cst_244 : f32 to vector<16x32xf32>
    %754 = arith.subf %753, %616 : vector<16x32xf32>
    %755 = arith.mulf %754, %679 : vector<16x32xf32>
    %756 = arith.addf %752, %755 : vector<16x32xf32>
    %cst_245 = arith.constant 2.000000e+00 : f32
    %757 = vector.broadcast %cst_245 : f32 to vector<16x32xf32>
    %758 = arith.mulf %756, %757 : vector<16x32xf32>
    %cst_246 = arith.constant 1.500000e+00 : f32
    %759 = vector.broadcast %cst_246 : f32 to vector<16x32xf32>
    %760 = arith.subf %616, %759 : vector<16x32xf32>
    %761 = arith.mulf %760, %679 : vector<16x32xf32>
    %cst_247 = arith.constant 2.500000e+00 : f32
    %762 = vector.broadcast %cst_247 : f32 to vector<16x32xf32>
    %763 = arith.subf %762, %616 : vector<16x32xf32>
    %764 = arith.mulf %763, %686 : vector<16x32xf32>
    %765 = arith.addf %761, %764 : vector<16x32xf32>
    %cst_248 = arith.constant 2.000000e+00 : f32
    %766 = vector.broadcast %cst_248 : f32 to vector<16x32xf32>
    %767 = arith.mulf %765, %766 : vector<16x32xf32>
    %cst_249 = arith.constant -2.500000e+00 : f32
    %768 = vector.broadcast %cst_249 : f32 to vector<16x32xf32>
    %769 = arith.subf %616, %768 : vector<16x32xf32>
    %770 = arith.mulf %769, %695 : vector<16x32xf32>
    %cst_250 = arith.constant -1.000000e+00 : f32
    %771 = vector.broadcast %cst_250 : f32 to vector<16x32xf32>
    %772 = arith.subf %771, %616 : vector<16x32xf32>
    %773 = arith.mulf %772, %704 : vector<16x32xf32>
    %774 = arith.addf %770, %773 : vector<16x32xf32>
    %cst_251 = arith.constant 1.000000e+00 : f32
    %775 = vector.broadcast %cst_251 : f32 to vector<16x32xf32>
    %776 = arith.mulf %774, %775 : vector<16x32xf32>
    %cst_252 = arith.constant -2.000000e+00 : f32
    %777 = vector.broadcast %cst_252 : f32 to vector<16x32xf32>
    %778 = arith.subf %616, %777 : vector<16x32xf32>
    %779 = arith.mulf %778, %704 : vector<16x32xf32>
    %cst_253 = arith.constant -5.000000e-01 : f32
    %780 = vector.broadcast %cst_253 : f32 to vector<16x32xf32>
    %781 = arith.subf %780, %616 : vector<16x32xf32>
    %782 = arith.mulf %781, %713 : vector<16x32xf32>
    %783 = arith.addf %779, %782 : vector<16x32xf32>
    %cst_254 = arith.constant 1.000000e+00 : f32
    %784 = vector.broadcast %cst_254 : f32 to vector<16x32xf32>
    %785 = arith.mulf %783, %784 : vector<16x32xf32>
    %cst_255 = arith.constant -1.500000e+00 : f32
    %786 = vector.broadcast %cst_255 : f32 to vector<16x32xf32>
    %787 = arith.subf %616, %786 : vector<16x32xf32>
    %788 = arith.mulf %787, %713 : vector<16x32xf32>
    %cst_256 = arith.constant 0.000000e+00 : f32
    %789 = vector.broadcast %cst_256 : f32 to vector<16x32xf32>
    %790 = arith.subf %789, %616 : vector<16x32xf32>
    %791 = arith.mulf %790, %722 : vector<16x32xf32>
    %792 = arith.addf %788, %791 : vector<16x32xf32>
    %cst_257 = arith.constant 1.000000e+00 : f32
    %793 = vector.broadcast %cst_257 : f32 to vector<16x32xf32>
    %794 = arith.mulf %792, %793 : vector<16x32xf32>
    %cst_258 = arith.constant -1.000000e+00 : f32
    %795 = vector.broadcast %cst_258 : f32 to vector<16x32xf32>
    %796 = arith.subf %616, %795 : vector<16x32xf32>
    %797 = arith.mulf %796, %722 : vector<16x32xf32>
    %cst_259 = arith.constant 5.000000e-01 : f32
    %798 = vector.broadcast %cst_259 : f32 to vector<16x32xf32>
    %799 = arith.subf %798, %616 : vector<16x32xf32>
    %800 = arith.mulf %799, %731 : vector<16x32xf32>
    %801 = arith.addf %797, %800 : vector<16x32xf32>
    %cst_260 = arith.constant 1.000000e+00 : f32
    %802 = vector.broadcast %cst_260 : f32 to vector<16x32xf32>
    %803 = arith.mulf %801, %802 : vector<16x32xf32>
    %cst_261 = arith.constant -5.000000e-01 : f32
    %804 = vector.broadcast %cst_261 : f32 to vector<16x32xf32>
    %805 = arith.subf %616, %804 : vector<16x32xf32>
    %806 = arith.mulf %805, %731 : vector<16x32xf32>
    %cst_262 = arith.constant 1.000000e+00 : f32
    %807 = vector.broadcast %cst_262 : f32 to vector<16x32xf32>
    %808 = arith.subf %807, %616 : vector<16x32xf32>
    %809 = arith.mulf %808, %740 : vector<16x32xf32>
    %810 = arith.addf %806, %809 : vector<16x32xf32>
    %cst_263 = arith.constant 1.000000e+00 : f32
    %811 = vector.broadcast %cst_263 : f32 to vector<16x32xf32>
    %812 = arith.mulf %810, %811 : vector<16x32xf32>
    %cst_264 = arith.constant 0.000000e+00 : f32
    %813 = vector.broadcast %cst_264 : f32 to vector<16x32xf32>
    %814 = arith.subf %616, %813 : vector<16x32xf32>
    %815 = arith.mulf %814, %740 : vector<16x32xf32>
    %cst_265 = arith.constant 1.500000e+00 : f32
    %816 = vector.broadcast %cst_265 : f32 to vector<16x32xf32>
    %817 = arith.subf %816, %616 : vector<16x32xf32>
    %818 = arith.mulf %817, %749 : vector<16x32xf32>
    %819 = arith.addf %815, %818 : vector<16x32xf32>
    %cst_266 = arith.constant 1.000000e+00 : f32
    %820 = vector.broadcast %cst_266 : f32 to vector<16x32xf32>
    %821 = arith.mulf %819, %820 : vector<16x32xf32>
    %cst_267 = arith.constant 5.000000e-01 : f32
    %822 = vector.broadcast %cst_267 : f32 to vector<16x32xf32>
    %823 = arith.subf %616, %822 : vector<16x32xf32>
    %824 = arith.mulf %823, %749 : vector<16x32xf32>
    %cst_268 = arith.constant 2.000000e+00 : f32
    %825 = vector.broadcast %cst_268 : f32 to vector<16x32xf32>
    %826 = arith.subf %825, %616 : vector<16x32xf32>
    %827 = arith.mulf %826, %758 : vector<16x32xf32>
    %828 = arith.addf %824, %827 : vector<16x32xf32>
    %cst_269 = arith.constant 1.000000e+00 : f32
    %829 = vector.broadcast %cst_269 : f32 to vector<16x32xf32>
    %830 = arith.mulf %828, %829 : vector<16x32xf32>
    %cst_270 = arith.constant 1.000000e+00 : f32
    %831 = vector.broadcast %cst_270 : f32 to vector<16x32xf32>
    %832 = arith.subf %616, %831 : vector<16x32xf32>
    %833 = arith.mulf %832, %758 : vector<16x32xf32>
    %cst_271 = arith.constant 2.500000e+00 : f32
    %834 = vector.broadcast %cst_271 : f32 to vector<16x32xf32>
    %835 = arith.subf %834, %616 : vector<16x32xf32>
    %836 = arith.mulf %835, %767 : vector<16x32xf32>
    %837 = arith.addf %833, %836 : vector<16x32xf32>
    %cst_272 = arith.constant 1.000000e+00 : f32
    %838 = vector.broadcast %cst_272 : f32 to vector<16x32xf32>
    %839 = arith.mulf %837, %838 : vector<16x32xf32>
    %cst_273 = arith.constant -2.500000e+00 : f32
    %840 = vector.broadcast %cst_273 : f32 to vector<16x32xf32>
    %841 = arith.subf %616, %840 : vector<16x32xf32>
    %842 = arith.mulf %841, %776 : vector<16x32xf32>
    %cst_274 = arith.constant -5.000000e-01 : f32
    %843 = vector.broadcast %cst_274 : f32 to vector<16x32xf32>
    %844 = arith.subf %843, %616 : vector<16x32xf32>
    %845 = arith.mulf %844, %785 : vector<16x32xf32>
    %846 = arith.addf %842, %845 : vector<16x32xf32>
    %cst_275 = arith.constant 0.666666686 : f32
    %847 = vector.broadcast %cst_275 : f32 to vector<16x32xf32>
    %848 = arith.mulf %846, %847 : vector<16x32xf32>
    %cst_276 = arith.constant -2.000000e+00 : f32
    %849 = vector.broadcast %cst_276 : f32 to vector<16x32xf32>
    %850 = arith.subf %616, %849 : vector<16x32xf32>
    %851 = arith.mulf %850, %785 : vector<16x32xf32>
    %cst_277 = arith.constant 0.000000e+00 : f32
    %852 = vector.broadcast %cst_277 : f32 to vector<16x32xf32>
    %853 = arith.subf %852, %616 : vector<16x32xf32>
    %854 = arith.mulf %853, %794 : vector<16x32xf32>
    %855 = arith.addf %851, %854 : vector<16x32xf32>
    %cst_278 = arith.constant 0.666666686 : f32
    %856 = vector.broadcast %cst_278 : f32 to vector<16x32xf32>
    %857 = arith.mulf %855, %856 : vector<16x32xf32>
    %cst_279 = arith.constant -1.500000e+00 : f32
    %858 = vector.broadcast %cst_279 : f32 to vector<16x32xf32>
    %859 = arith.subf %616, %858 : vector<16x32xf32>
    %860 = arith.mulf %859, %794 : vector<16x32xf32>
    %cst_280 = arith.constant 5.000000e-01 : f32
    %861 = vector.broadcast %cst_280 : f32 to vector<16x32xf32>
    %862 = arith.subf %861, %616 : vector<16x32xf32>
    %863 = arith.mulf %862, %803 : vector<16x32xf32>
    %864 = arith.addf %860, %863 : vector<16x32xf32>
    %cst_281 = arith.constant 0.666666686 : f32
    %865 = vector.broadcast %cst_281 : f32 to vector<16x32xf32>
    %866 = arith.mulf %864, %865 : vector<16x32xf32>
    %cst_282 = arith.constant -1.000000e+00 : f32
    %867 = vector.broadcast %cst_282 : f32 to vector<16x32xf32>
    %868 = arith.subf %616, %867 : vector<16x32xf32>
    %869 = arith.mulf %868, %803 : vector<16x32xf32>
    %cst_283 = arith.constant 1.000000e+00 : f32
    %870 = vector.broadcast %cst_283 : f32 to vector<16x32xf32>
    %871 = arith.subf %870, %616 : vector<16x32xf32>
    %872 = arith.mulf %871, %812 : vector<16x32xf32>
    %873 = arith.addf %869, %872 : vector<16x32xf32>
    %cst_284 = arith.constant 0.666666686 : f32
    %874 = vector.broadcast %cst_284 : f32 to vector<16x32xf32>
    %875 = arith.mulf %873, %874 : vector<16x32xf32>
    %cst_285 = arith.constant -5.000000e-01 : f32
    %876 = vector.broadcast %cst_285 : f32 to vector<16x32xf32>
    %877 = arith.subf %616, %876 : vector<16x32xf32>
    %878 = arith.mulf %877, %812 : vector<16x32xf32>
    %cst_286 = arith.constant 1.500000e+00 : f32
    %879 = vector.broadcast %cst_286 : f32 to vector<16x32xf32>
    %880 = arith.subf %879, %616 : vector<16x32xf32>
    %881 = arith.mulf %880, %821 : vector<16x32xf32>
    %882 = arith.addf %878, %881 : vector<16x32xf32>
    %cst_287 = arith.constant 0.666666686 : f32
    %883 = vector.broadcast %cst_287 : f32 to vector<16x32xf32>
    %884 = arith.mulf %882, %883 : vector<16x32xf32>
    %cst_288 = arith.constant 0.000000e+00 : f32
    %885 = vector.broadcast %cst_288 : f32 to vector<16x32xf32>
    %886 = arith.subf %616, %885 : vector<16x32xf32>
    %887 = arith.mulf %886, %821 : vector<16x32xf32>
    %cst_289 = arith.constant 2.000000e+00 : f32
    %888 = vector.broadcast %cst_289 : f32 to vector<16x32xf32>
    %889 = arith.subf %888, %616 : vector<16x32xf32>
    %890 = arith.mulf %889, %830 : vector<16x32xf32>
    %891 = arith.addf %887, %890 : vector<16x32xf32>
    %cst_290 = arith.constant 0.666666686 : f32
    %892 = vector.broadcast %cst_290 : f32 to vector<16x32xf32>
    %893 = arith.mulf %891, %892 : vector<16x32xf32>
    %cst_291 = arith.constant 5.000000e-01 : f32
    %894 = vector.broadcast %cst_291 : f32 to vector<16x32xf32>
    %895 = arith.subf %616, %894 : vector<16x32xf32>
    %896 = arith.mulf %895, %830 : vector<16x32xf32>
    %cst_292 = arith.constant 2.500000e+00 : f32
    %897 = vector.broadcast %cst_292 : f32 to vector<16x32xf32>
    %898 = arith.subf %897, %616 : vector<16x32xf32>
    %899 = arith.mulf %898, %839 : vector<16x32xf32>
    %900 = arith.addf %896, %899 : vector<16x32xf32>
    %cst_293 = arith.constant 0.666666686 : f32
    %901 = vector.broadcast %cst_293 : f32 to vector<16x32xf32>
    %902 = arith.mulf %900, %901 : vector<16x32xf32>
    %903 = arith.negf %616 : vector<16x32xf32>
    %904 = math.exp %903 : vector<16x32xf32>
    %cst_294 = arith.constant 1.000000e+00 : f32
    %905 = vector.broadcast %cst_294 : f32 to vector<16x32xf32>
    %906 = arith.addf %905, %904 : vector<16x32xf32>
    %907 = arith.divf %905, %906 : vector<16x32xf32>
    %908 = arith.mulf %616, %907 : vector<16x32xf32>
    %909 = tpu.concatenate %908, %848, %857, %866, %875, %884, %893, %902 in 1 : vector<16x32xf32>, vector<16x32xf32>, vector<16x32xf32>, vector<16x32xf32>, vector<16x32xf32>, vector<16x32xf32>, vector<16x32xf32>, vector<16x32xf32> -> vector<16x256xf32>
    %910 = arith.truncf %909 : vector<16x256xf32> to vector<16x256xbf16>
    %c0_295 = arith.constant 0 : index
    %c0_296 = arith.constant 0 : index
    %911 = vector.load %arg6[%c0_295, %c0_296] : memref<256x128xbf16, #tpu.memory_space<vmem>>, vector<256x128xbf16>
    %cst_297 = arith.constant dense<0.000000e+00> : vector<16x128xf32>
    %912 = tpu.matmul %910, %911, %cst_297 {dimension_numbers = #tpu.dot_dimension_numbers<[1], [0], [0], [1], [0, 0, 1, 1], [], []>} : vector<16x256xbf16>, vector<256x128xbf16>, vector<16x128xf32> -> vector<16x128xf32>
    %913 = tpu.iota {dimensions = array<i32: 1>} : vector<1x128xi32>
    %c4_i32 = arith.constant 4 : i32
    %914 = vector.broadcast %c4_i32 : i32 to vector<1x128xi32>
    %915 = arith.cmpi slt, %913, %914 : vector<1x128xi32>
    %cst_298 = arith.constant -1.000000e+30 : f32
    %916 = vector.shape_cast %915 : vector<1x128xi1> to vector<1x128xi1>
    %917 = vector.broadcast %916 : vector<1x128xi1> to vector<16x128xi1>
    %918 = vector.broadcast %cst_298 : f32 to vector<16x128xf32>
    %919 = arith.select %917, %912, %918 : vector<16x128xi1>, vector<16x128xf32>
    %cst_299 = arith.constant dense<0xFF800000> : vector<16xf32>
    %920 = vector.multi_reduction <maximumf>, %919, %cst_299 [1] : vector<16x128xf32> to vector<16xf32>
    %921 = vector.shape_cast %920 : vector<16xf32> to vector<16x1xf32>
    %922 = vector.broadcast %921 : vector<16x1xf32> to vector<16x128xf32>
    %923 = arith.subf %919, %922 : vector<16x128xf32>
    %924 = math.exp %923 : vector<16x128xf32>
    %cst_300 = arith.constant dense<0.000000e+00> : vector<16xf32>
    %925 = vector.multi_reduction <add>, %924, %cst_300 [1] : vector<16x128xf32> to vector<16xf32>
    %926 = vector.shape_cast %925 : vector<16xf32> to vector<16x1xf32>
    %927 = math.log %926 : vector<16x1xf32>
    %928 = vector.broadcast %927 : vector<16x1xf32> to vector<16x128xf32>
    %929 = arith.subf %923, %928 : vector<16x128xf32>
    %c0_301 = arith.constant 0 : index
    %c0_302 = arith.constant 0 : index
    %930 = vector.load %arg7[%c0_301, %c0_302] : memref<16x128xf32, #tpu.memory_space<vmem>>, vector<16x128xf32>
    tpu.vector_store %arg7[%c0_301, %c0_302], %929 {strides = array<i32>} : memref<16x128xf32, #tpu.memory_space<vmem>>, vector<16x128xf32>,
    return
  }
}

</mosaic_0001>

<llo_original>
// kernel: tpu_custom_call.1
$region0: #{tpu_custom_call.1}
  #allocation0 [shape = 'u32[]', space=smem, size = 0x4, offset = 0x4, fixed_abs, tag = 'smem constant byte address 0x4 - core index']
  #allocation1 [shape = 'u32[144,128]{1,0:T(1,128)}', space=vmem, size = 0x12000, scoped, tag = 'internal scratch']
  %s0 = inlined_call_operand.vmem [shape: f32[16,8], index: 0, kind: input, shape index: {}]
  %s1 = inlined_call_operand.vmem [shape: f32[16,16], index: 1, kind: input, shape index: {}]
  %s2 = inlined_call_operand.vmem [shape: bf16[64,32], index: 2, kind: input, shape index: {}]
  %s3 = inlined_call_operand.vmem [shape: f32[1,32], index: 3, kind: input, shape index: {}]
  %s4 = inlined_call_operand.vmem [shape: bf16[256,32], index: 4, kind: input, shape index: {}]
  %s5 = inlined_call_operand.vmem [shape: f32[1,32], index: 5, kind: input, shape index: {}]
  %s6 = inlined_call_operand.vmem [shape: bf16[256,128], index: 6, kind: input, shape index: {}]
  %s7 = inlined_call_operand.hbm [shape: f32[16,128], index: 7, kind: output, shape index: {}]
  %s8 = sld [smem:[#allocation0]]
  $region38: #{tpu_custom_call.1} parent=0
    _
  %s10 = ssub.s32 1, %s8
  %s11 = scalar_select 0, %s10, %s8
  $region1: #{tpu_custom_call.1} parent=0
    #allocation2 [shape = 'u8[8192]{0}', space=vmem, size = 0x2000, scoped, tag = 'output window, operand 0, single buffered']
    #allocation3 [shape = 's32[1]{0}', space=sflag, size = 0x4, scoped, tag = 'scoped memory for tpu_custom_call.1']
    %12 = vsyncpa [#allocation3], 0
    // Predicated region
    $region2: #{tpu_custom_call.1} parent=1 // pred_check
      _
    $region3: #{tpu_custom_call.1} parent=1 // pred_check_branch
      %14 = sbr.rel (0) target = $region5
    $region4: #{tpu_custom_call.1} parent=1 // pred_region
      _
    $region5: #{tpu_custom_call.1} parent=1 // pred_fallthru
      _
    // Predicated region
    $region6: #{tpu_custom_call.1} parent=1 // pred_check
      _
    $region7: #{tpu_custom_call.1} parent=1 // pred_check_branch
      %16 = sbr.rel (0) target = $region9
    $region8: #{tpu_custom_call.1} parent=1 // pred_region
      _
    $region9: #{tpu_custom_call.1} parent=1 // pred_fallthru
      _
    // Predicated region
    $region10: #{tpu_custom_call.1} parent=1 // pred_check
      _
    $region11: #{tpu_custom_call.1} parent=1 // pred_check_branch
      %18 = sbr.rel (0) target = $region13
    $region12: #{tpu_custom_call.1} parent=1 // pred_region
      _
    $region13: #{tpu_custom_call.1} parent=1 // pred_fallthru
      _
    // Predicated region
    $region14: #{tpu_custom_call.1} parent=1 // pred_check
      _
    $region15: #{tpu_custom_call.1} parent=1 // pred_check_branch
      %20 = sbr.rel (0) target = $region17
    $region16: #{tpu_custom_call.1} parent=1 // pred_region
      _
    $region17: #{tpu_custom_call.1} parent=1 // pred_fallthru
      _
    // Predicated region
    $region18: #{tpu_custom_call.1} parent=1 // pred_check
      _
    $region19: #{tpu_custom_call.1} parent=1 // pred_check_branch
      %22 = sbr.rel (0) target = $region21
    $region20: #{tpu_custom_call.1} parent=1 // pred_region
      _
    $region21: #{tpu_custom_call.1} parent=1 // pred_fallthru
      _
    // Predicated region
    $region22: #{tpu_custom_call.1} parent=1 // pred_check
      _
    $region23: #{tpu_custom_call.1} parent=1 // pred_check_branch
      %24 = sbr.rel (0) target = $region25
    $region24: #{tpu_custom_call.1} parent=1 // pred_region
      _
    $region25: #{tpu_custom_call.1} parent=1 // pred_fallthru
      _
    // Predicated region
    $region26: #{tpu_custom_call.1} parent=1 // pred_check
      _
    $region27: #{tpu_custom_call.1} parent=1 // pred_check_branch
      %26 = sbr.rel (0) target = $region29
    $region28: #{tpu_custom_call.1} parent=1 // pred_region
      _
    $region29: #{tpu_custom_call.1} parent=1 // pred_fallthru
      _
    %v28 = vld [vmem:[%s1] sm:$0xff]
    %v29 = vld [vmem:[%s1 + $0x8] sm:$0xff]
    %v30 = vpack.c.bf16 %v29, %v28
    %v31 = vld [vmem:[%s0] sm:$0xff]
    %v32 = vld [vmem:[%s0 + $0x8] sm:$0xff]
    %vm33 = vcmp.ge.f32.partialorder %v31, -2.5
    %vm34 = vcmp.ge.f32.partialorder %v32, -2.5
    %vm35 = vcmp.lt.f32.partialorder %v31, -2.0
    %vm36 = vcmp.lt.f32.partialorder %v32, -2.0
    %vm37 = vmand %vm33, %vm35
    %vm38 = vmand %vm34, %vm36
    %v39 = vsel %vm37, 1, 0
    %v40 = vsel %vm38, 1, 0
    %v41 = vcvt.s32.f32 %v39
    %v42 = vcvt.s32.f32 %v40
    %vm43 = vcmp.ge.f32.partialorder %v31, -2.0
    %vm44 = vcmp.ge.f32.partialorder %v32, -2.0
    %vm45 = vcmp.lt.f32.partialorder %v31, -1.5
    %vm46 = vcmp.lt.f32.partialorder %v32, -1.5
    %vm47 = vmand %vm43, %vm45
    %vm48 = vmand %vm44, %vm46
    %v49 = vsel %vm47, 1, 0
    %v50 = vsel %vm48, 1, 0
    %v51 = vcvt.s32.f32 %v49
    %v52 = vcvt.s32.f32 %v50
    %vm53 = vcmp.ge.f32.partialorder %v31, -1.5
    %vm54 = vcmp.ge.f32.partialorder %v32, -1.5
    %vm55 = vcmp.lt.f32.partialorder %v31, -1.0
    %vm56 = vcmp.lt.f32.partialorder %v32, -1.0
    %vm57 = vmand %vm53, %vm55
    %vm58 = vmand %vm54, %vm56
    %v59 = vsel %vm57, 1, 0
    %v60 = vsel %vm58, 1, 0
    %v61 = vcvt.s32.f32 %v59
    %v62 = vcvt.s32.f32 %v60
    %vm63 = vcmp.ge.f32.partialorder %v31, -1.0
    %vm64 = vcmp.ge.f32.partialorder %v32, -1.0
    %vm65 = vcmp.lt.f32.partialorder %v31, -0.5
    %vm66 = vcmp.lt.f32.partialorder %v32, -0.5
    %vm67 = vmand %vm63, %vm65
    %vm68 = vmand %vm64, %vm66
    %v69 = vsel %vm67, 1, 0
    %v70 = vsel %vm68, 1, 0
    %v71 = vcvt.s32.f32 %v69
    %v72 = vcvt.s32.f32 %v70
    %vm73 = vcmp.ge.f32.partialorder %v31, -0.5
    %vm74 = vcmp.ge.f32.partialorder %v32, -0.5
    %vm75 = vcmp.lt.f32.partialorder %v31, 0.0
    %vm76 = vcmp.lt.f32.partialorder %v32, 0.0
    %vm77 = vmand %vm73, %vm75
    %vm78 = vmand %vm74, %vm76
    %v79 = vsel %vm77, 1, 0
    %v80 = vsel %vm78, 1, 0
    %v81 = vcvt.s32.f32 %v79
    %v82 = vcvt.s32.f32 %v80
    %vm83 = vcmp.ge.f32.partialorder %v31, 0.0
    %vm84 = vcmp.ge.f32.partialorder %v32, 0.0
    %vm85 = vcmp.lt.f32.partialorder %v31, 0.5
    %vm86 = vcmp.lt.f32.partialorder %v32, 0.5
    %vm87 = vmand %vm83, %vm85
    %vm88 = vmand %vm84, %vm86
    %v89 = vsel %vm87, 1, 0
    %v90 = vsel %vm88, 1, 0
    %v91 = vcvt.s32.f32 %v89
    %v92 = vcvt.s32.f32 %v90
    %vm93 = vcmp.ge.f32.partialorder %v31, 0.5
    %vm94 = vcmp.ge.f32.partialorder %v32, 0.5
    %vm95 = vcmp.lt.f32.partialorder %v31, 1.0
    %vm96 = vcmp.lt.f32.partialorder %v32, 1.0
    %vm97 = vmand %vm93, %vm95
    %vm98 = vmand %vm94, %vm96
    %v99 = vsel %vm97, 1, 0
    %v100 = vsel %vm98, 1, 0
    %v101 = vcvt.s32.f32 %v99
    %v102 = vcvt.s32.f32 %v100
    %vm103 = vcmp.ge.f32.partialorder %v31, 1.0
    %vm104 = vcmp.ge.f32.partialorder %v32, 1.0
    %vm105 = vcmp.lt.f32.partialorder %v31, 1.5
    %vm106 = vcmp.lt.f32.partialorder %v32, 1.5
    %vm107 = vmand %vm103, %vm105
    %vm108 = vmand %vm104, %vm106
    %v109 = vsel %vm107, 1, 0
    %v110 = vsel %vm108, 1, 0
    %v111 = vcvt.s32.f32 %v109
    %v112 = vcvt.s32.f32 %v110
    %vm113 = vcmp.ge.f32.partialorder %v31, 1.5
    %vm114 = vcmp.ge.f32.partialorder %v32, 1.5
    %vm115 = vcmp.lt.f32.partialorder %v31, 2.0
    %vm116 = vcmp.lt.f32.partialorder %v32, 2.0
    %vm117 = vmand %vm113, %vm115
    %vm118 = vmand %vm114, %vm116
    %v119 = vsel %vm117, 1, 0
    %v120 = vsel %vm118, 1, 0
    %v121 = vcvt.s32.f32 %v119
    %v122 = vcvt.s32.f32 %v120
    %vm123 = vcmp.ge.f32.partialorder %v31, 2.0
    %vm124 = vcmp.ge.f32.partialorder %v32, 2.0
    %vm125 = vcmp.lt.f32.partialorder %v31, 2.5
    %vm126 = vcmp.lt.f32.partialorder %v32, 2.5
    %vm127 = vmand %vm123, %vm125
    %vm128 = vmand %vm124, %vm126
    %v129 = vsel %vm127, 1, 0
    %v130 = vsel %vm128, 1, 0
    %v131 = vcvt.s32.f32 %v129
    %v132 = vcvt.s32.f32 %v130
    %v133 = vsub.f32 %v31, -2.5
    %v134 = vsub.f32 %v32, -2.5
    %v135 = vmul.f32 %v133, %v41
    %v136 = vmul.f32 %v134, %v42
    %v137 = vsub.f32 -1.5, %v31
    %v138 = vsub.f32 -1.5, %v32
    %v139 = vmul.f32 %v137, %v51
    %v140 = vmul.f32 %v138, %v52
    %v141 = vadd.f32 %v135, %v139
    %v142 = vadd.f32 %v136, %v140
    %v143 = vmul.f32 %v141, 2.0
    %v144 = vmul.f32 %v142, 2.0
    %v145 = vsub.f32 %v31, -2.0
    %v146 = vsub.f32 %v32, -2.0
    %v147 = vmul.f32 %v145, %v51
    %v148 = vmul.f32 %v146, %v52
    %v149 = vsub.f32 -1.0, %v31
    %v150 = vsub.f32 -1.0, %v32
    %v151 = vmul.f32 %v149, %v61
    %v152 = vmul.f32 %v150, %v62
    %v153 = vadd.f32 %v147, %v151
    %v154 = vadd.f32 %v148, %v152
    %v155 = vmul.f32 %v153, 2.0
    %v156 = vmul.f32 %v154, 2.0
    %v157 = vsub.f32 %v31, -1.5
    %v158 = vsub.f32 %v32, -1.5
    %v159 = vmul.f32 %v157, %v61
    %v160 = vmul.f32 %v158, %v62
    %v161 = vsub.f32 -0.5, %v31
    %v162 = vsub.f32 -0.5, %v32
    %v163 = vmul.f32 %v161, %v71
    %v164 = vmul.f32 %v162, %v72
    %v165 = vadd.f32 %v159, %v163
    %v166 = vadd.f32 %v160, %v164
    %v167 = vmul.f32 %v165, 2.0
    %v168 = vmul.f32 %v166, 2.0
    %v169 = vsub.f32 %v31, -1.0
    %v170 = vsub.f32 %v32, -1.0
    %v171 = vmul.f32 %v169, %v71
    %v172 = vmul.f32 %v170, %v72
    %v173 = vsub.f32 0.0, %v31
    %v174 = vsub.f32 0.0, %v32
    %v175 = vmul.f32 %v173, %v81
    %v176 = vmul.f32 %v174, %v82
    %v177 = vadd.f32 %v171, %v175
    %v178 = vadd.f32 %v172, %v176
    %v179 = vmul.f32 %v177, 2.0
    %v180 = vmul.f32 %v178, 2.0
    %v181 = vsub.f32 %v31, -0.5
    %v182 = vsub.f32 %v32, -0.5
    %v183 = vmul.f32 %v181, %v81
    %v184 = vmul.f32 %v182, %v82
    %v185 = vsub.f32 0.5, %v31
    %v186 = vsub.f32 0.5, %v32
    %v187 = vmul.f32 %v185, %v91
    %v188 = vmul.f32 %v186, %v92
    %v189 = vadd.f32 %v183, %v187
    %v190 = vadd.f32 %v184, %v188
    %v191 = vmul.f32 %v189, 2.0
    %v192 = vmul.f32 %v190, 2.0
    %v193 = vmul.f32 %v31, %v91
    %v194 = vmul.f32 %v32, %v92
    %v195 = vsub.f32 1.0, %v31
    %v196 = vsub.f32 1.0, %v32
    %v197 = vmul.f32 %v195, %v101
    %v198 = vmul.f32 %v196, %v102
    %v199 = vadd.f32 %v193, %v197
    %v200 = vadd.f32 %v194, %v198
    %v201 = vmul.f32 %v199, 2.0
    %v202 = vmul.f32 %v200, 2.0
    %v203 = vsub.f32 %v31, 0.5
    %v204 = vsub.f32 %v32, 0.5
    %v205 = vmul.f32 %v203, %v101
    %v206 = vmul.f32 %v204, %v102
    %v207 = vsub.f32 1.5, %v31
    %v208 = vsub.f32 1.5, %v32
    %v209 = vmul.f32 %v207, %v111
    %v210 = vmul.f32 %v208, %v112
    %v211 = vadd.f32 %v205, %v209
    %v212 = vadd.f32 %v206, %v210
    %v213 = vmul.f32 %v211, 2.0
    %v214 = vmul.f32 %v212, 2.0
    %v215 = vsub.f32 %v31, 1.0
    %v216 = vsub.f32 %v32, 1.0
    %v217 = vmul.f32 %v215, %v111
    %v218 = vmul.f32 %v216, %v112
    %v219 = vsub.f32 2.0, %v31
    %v220 = vsub.f32 2.0, %v32
    %v221 = vmul.f32 %v219, %v121
    %v222 = vmul.f32 %v220, %v122
    %v223 = vadd.f32 %v217, %v221
    %v224 = vadd.f32 %v218, %v222
    %v225 = vmul.f32 %v223, 2.0
    %v226 = vmul.f32 %v224, 2.0
    %v227 = vsub.f32 %v31, 1.5
    %v228 = vsub.f32 %v32, 1.5
    %v229 = vmul.f32 %v227, %v121
    %v230 = vmul.f32 %v228, %v122
    %v231 = vsub.f32 2.5, %v31
    %v232 = vsub.f32 2.5, %v32
    %v233 = vmul.f32 %v231, %v131
    %v234 = vmul.f32 %v232, %v132
    %v235 = vadd.f32 %v229, %v233
    %v236 = vadd.f32 %v230, %v234
    %v237 = vmul.f32 %v235, 2.0
    %v238 = vmul.f32 %v236, 2.0
    %v239 = vmul.f32 %v133, %v143
    %v240 = vmul.f32 %v134, %v144
    %v241 = vmul.f32 %v149, %v155
    %v242 = vmul.f32 %v150, %v156
    %v243 = vadd.f32 %v239, %v241
    %v244 = vadd.f32 %v240, %v242
    %v245 = vmul.f32 %v145, %v155
    %v246 = vmul.f32 %v146, %v156
    %v247 = vmul.f32 %v161, %v167
    %v248 = vmul.f32 %v162, %v168
    %v249 = vadd.f32 %v245, %v247
    %v250 = vadd.f32 %v246, %v248
    %v251 = vmul.f32 %v157, %v167
    %v252 = vmul.f32 %v158, %v168
    %v253 = vmul.f32 %v173, %v179
    %v254 = vmul.f32 %v174, %v180
    %v255 = vadd.f32 %v251, %v253
    %v256 = vadd.f32 %v252, %v254
    %v257 = vmul.f32 %v169, %v179
    %v258 = vmul.f32 %v170, %v180
    %v259 = vmul.f32 %v185, %v191
    %v260 = vmul.f32 %v186, %v192
    %v261 = vadd.f32 %v257, %v259
    %v262 = vadd.f32 %v258, %v260
    %v263 = vmul.f32 %v181, %v191
    %v264 = vmul.f32 %v182, %v192
    %v265 = vmul.f32 %v195, %v201
    %v266 = vmul.f32 %v196, %v202
    %v267 = vadd.f32 %v263, %v265
    %v268 = vadd.f32 %v264, %v266
    %v269 = vmul.f32 %v31, %v201
    %v270 = vmul.f32 %v32, %v202
    %v271 = vmul.f32 %v207, %v213
    %v272 = vmul.f32 %v208, %v214
    %v273 = vadd.f32 %v269, %v271
    %v274 = vadd.f32 %v270, %v272
    %v275 = vmul.f32 %v203, %v213
    %v276 = vmul.f32 %v204, %v214
    %v277 = vmul.f32 %v219, %v225
    %v278 = vmul.f32 %v220, %v226
    %v279 = vadd.f32 %v275, %v277
    %v280 = vadd.f32 %v276, %v278
    %v281 = vmul.f32 %v215, %v225
    %v282 = vmul.f32 %v216, %v226
    %v283 = vmul.f32 %v231, %v237
    %v284 = vmul.f32 %v232, %v238
    %v285 = vadd.f32 %v281, %v283
    %v286 = vadd.f32 %v282, %v284
    %v287 = vmul.f32 %v133, %v243
    %v288 = vmul.f32 %v134, %v244
    %v289 = vmul.f32 %v161, %v249
    %v290 = vmul.f32 %v162, %v250
    %v291 = vadd.f32 %v287, %v289
    %v292 = vadd.f32 %v288, %v290
    %v293 = vmul.f32 %v291, 0.6666667
    %v294 = vmul.f32 %v292, 0.6666667
    %v295 = vmul.f32 %v145, %v249
    %v296 = vmul.f32 %v146, %v250
    %v297 = vmul.f32 %v173, %v255
    %v298 = vmul.f32 %v174, %v256
    %v299 = vadd.f32 %v295, %v297
    %v300 = vadd.f32 %v296, %v298
    %v301 = vmul.f32 %v299, 0.6666667
    %v302 = vmul.f32 %v300, 0.6666667
    %v303 = vmul.f32 %v157, %v255
    %v304 = vmul.f32 %v158, %v256
    %v305 = vmul.f32 %v185, %v261
    %v306 = vmul.f32 %v186, %v262
    %v307 = vadd.f32 %v303, %v305
    %v308 = vadd.f32 %v304, %v306
    %v309 = vmul.f32 %v307, 0.6666667
    %v310 = vmul.f32 %v308, 0.6666667
    %v311 = vmul.f32 %v169, %v261
    %v312 = vmul.f32 %v170, %v262
    %v313 = vmul.f32 %v195, %v267
    %v314 = vmul.f32 %v196, %v268
    %v315 = vadd.f32 %v311, %v313
    %v316 = vadd.f32 %v312, %v314
    %v317 = vmul.f32 %v315, 0.6666667
    %v318 = vmul.f32 %v316, 0.6666667
    %v319 = vmul.f32 %v181, %v267
    %v320 = vmul.f32 %v182, %v268
    %v321 = vmul.f32 %v207, %v273
    %v322 = vmul.f32 %v208, %v274
    %v323 = vadd.f32 %v319, %v321
    %v324 = vadd.f32 %v320, %v322
    %v325 = vmul.f32 %v323, 0.6666667
    %v326 = vmul.f32 %v324, 0.6666667
    %v327 = vmul.f32 %v31, %v273
    %v328 = vmul.f32 %v32, %v274
    %v329 = vmul.f32 %v219, %v279
    %v330 = vmul.f32 %v220, %v280
    %v331 = vadd.f32 %v327, %v329
    %v332 = vadd.f32 %v328, %v330
    %v333 = vmul.f32 %v331, 0.6666667
    %v334 = vmul.f32 %v332, 0.6666667
    %v335 = vmul.f32 %v203, %v279
    %v336 = vmul.f32 %v204, %v280
    %v337 = vmul.f32 %v231, %v285
    %v338 = vmul.f32 %v232, %v286
    %v339 = vadd.f32 %v335, %v337
    %v340 = vadd.f32 %v336, %v338
    %v341 = vmul.f32 %v339, 0.6666667
    %v342 = vmul.f32 %v340, 0.6666667
    %v343 = vxor.u32 %v31, 2147483648
    %v344 = vxor.u32 %v32, 2147483648
    %v345 = vmul.f32 %v343, 1.442695
    %v346 = vpow.pop %v345
    %v347 = vmul.f32 %v344, 1.442695
    %v348 = vpow.pop %v347
    %v349 = vadd.f32 %v346, 1.0
    %v350 = vadd.f32 %v348, 1.0
    %v351 = vrcp.pop %v349
    %v352 = vmul.f32 1.0, %v351
    %v353 = vrcp.pop %v350
    %v354 = vmul.f32 1.0, %v353
    %v355 = vmul.f32 %v31, %v352
    %v356 = vmul.f32 %v32, %v354
    %359 = vrot.lane.b32.xlu0 %v293, 8
    %v360 = vpop.permute.xlu0 %359
    %361 = vrot.lane.b32.xlu0 %v294, 8
    %v362 = vpop.permute.xlu0 %361
    %367 = vrot.lane.b32.xlu0 %v301, 16
    %v368 = vpop.permute.xlu0 %367
    %369 = vrot.lane.b32.xlu0 %v302, 16
    %v370 = vpop.permute.xlu0 %369
    %375 = vrot.lane.b32.xlu0 %v309, 24
    %v376 = vpop.permute.xlu0 %375
    %377 = vrot.lane.b32.xlu0 %v310, 24
    %v378 = vpop.permute.xlu0 %377
    %383 = vrot.lane.b32.xlu0 %v317, 32
    %v384 = vpop.permute.xlu0 %383
    %385 = vrot.lane.b32.xlu0 %v318, 32
    %v386 = vpop.permute.xlu0 %385
    %391 = vrot.lane.b32.xlu0 %v325, 40
    %v392 = vpop.permute.xlu0 %391
    %393 = vrot.lane.b32.xlu0 %v326, 40
    %v394 = vpop.permute.xlu0 %393
    %399 = vrot.lane.b32.xlu0 %v333, 48
    %v400 = vpop.permute.xlu0 %399
    %401 = vrot.lane.b32.xlu0 %v334, 48
    %v402 = vpop.permute.xlu0 %401
    %407 = vrot.lane.b32.xlu0 %v341, 56
    %v408 = vpop.permute.xlu0 %407
    %409 = vrot.lane.b32.xlu0 %v342, 56
    %v410 = vpop.permute.xlu0 %409
    %vm413 = vcmask 64512
    %v414 = vsel %vm413, %v355, %v360
    %v415 = vsel %vm413, %v356, %v362
    %vm416 = vcmask 130048
    %v417 = vsel %vm416, %v414, %v368
    %v418 = vsel %vm416, %v415, %v370
    %vm419 = vcmask 195584
    %v420 = vsel %vm419, %v417, %v376
    %v421 = vsel %vm419, %v418, %v378
    %vm422 = vcmask 261120
    %v423 = vsel %vm422, %v420, %v384
    %v424 = vsel %vm422, %v421, %v386
    %vm425 = vcmask 326656
    %v426 = vsel %vm425, %v423, %v392
    %v427 = vsel %vm425, %v424, %v394
    %vm428 = vcmask 392192
    %v429 = vsel %vm428, %v426, %v400
    %v430 = vsel %vm428, %v427, %v402
    %vm431 = vcmask 457728
    %v432 = vsel %vm431, %v429, %v408
    %v433 = vsel %vm431, %v430, %v410
    %v434 = vpack.c.bf16 %v433, %v432
    %v435 = vld [vmem:[%s2] sm:$0xf]
    %v436 = vld [vmem:[%s2 + $0x4] sm:$0xf]
    %v437 = vld [vmem:[%s2 + $0x8] sm:$0xf]
    %v438 = vld [vmem:[%s2 + $0xc] sm:$0xf]
    %v439 = vld [vmem:[%s2 + $0x10] sm:$0xf]
    %v440 = vld [vmem:[%s2 + $0x14] sm:$0xf]
    %v441 = vld [vmem:[%s2 + $0x18] sm:$0xf]
    %v442 = vld [vmem:[%s2 + $0x1c] sm:$0xf]
    %v451 = vunpack.c.l.b16 %v435
    %v452 = vunpack.c.l.b16 %v436
    %v453 = vunpack.c.l.b16 %v437
    %v454 = vunpack.c.l.b16 %v438
    %v455 = vunpack.c.l.b16 %v439
    %v456 = vunpack.c.l.b16 %v440
    %v457 = vunpack.c.l.b16 %v441
    %v458 = vunpack.c.l.b16 %v442
    %v459 = vpack.c.b16 %v452, %v451
    %v460 = vpack.c.b16 %v454, %v453
    %v461 = vpack.c.b16 %v456, %v455
    %v462 = vpack.c.b16 %v458, %v457
    %vm467 = vcmask 523264
    %v469 = vsel %vm467, %v434, 0
    %471 = vmatprep.subr.bf16.mxu0 0
    %472 = vmatpush1.bf16.msra.mxu0 0
    %473 = vmatprep.subr.bf16.mxu0 0
    %474 = vmatpush1.bf16.msra.mxu0 0
    %475 = vmatprep.subr.bf16.mxu0 0
    %476 = vmatpush1.bf16.msra.mxu0 0
    %477 = vmatprep.subr.bf16.mxu0 0
    %478 = vmatpush1.bf16.msra.mxu0 0
    %479 = vmatprep.subr.bf16.mxu0 0
    %480 = vmatpush1.bf16.msra.mxu0 %v462
    %481 = vmatprep.subr.bf16.mxu0 0
    %482 = vmatpush1.bf16.msra.mxu0 %v461
    %483 = vmatprep.subr.bf16.mxu0 0
    %484 = vmatpush1.bf16.msra.mxu0 %v460
    %485 = vmatprep.subr.bf16.mxu0 0
    %486 = vmatpush1.bf16.msra.mxu0 %v459
    %487 = vmatprep.subr.bf16.mxu0 0
    %488 = vmatpush2.bf16.msra.mxu0 0
    %489 = vmatprep.subr.bf16.mxu0 0
    %490 = vmatpush2.bf16.msra.mxu0 0
    %491 = vmatprep.subr.bf16.mxu0 0
    %492 = vmatpush2.bf16.msra.mxu0 0
    %493 = vmatprep.subr.bf16.mxu0 0
    %494 = vmatpush2.bf16.msra.mxu0 0
    %495 = vmatprep.subr.bf16.mxu0 0
    %496 = vmatpush2.bf16.msra.mxu0 0
    %497 = vmatprep.subr.bf16.mxu0 0
    %498 = vmatpush2.bf16.msra.mxu0 0
    %499 = vmatprep.subr.bf16.mxu0 0
    %500 = vmatpush2.bf16.msra.mxu0 0
    %501 = vmatprep.subr.bf16.mxu0 0
    %502 = vmatpush2.bf16.msra.mxu0 0
    %503 = vmatprep.mubr.bf16.mxu0 0
    %504 = vmatmul.mubr.bf16.gmra.mxu0 %v469
    %v505 = vpop.f32.mrf.mxu0
    %v506 = vadd.f32 0.0, %v505
    %v507 = vpop.f32.mrf.mxu0
    %v508 = vpop.f32.mrf.mxu0
    %v509 = vadd.f32 0.0, %v508
    %v510 = vpop.f32.mrf.mxu0
    %511 = vdwg.mxu0
    %v512 = vpack.c.bf16 %v509, %v506
    %v513 = vld [vmem:[%s3] sm:$0x1]
    %v515 = vlaneseq
    %v516 = vshrl.u32 %v515, 7
    %v517 = vsub.s32 0, %v516
    %v518 = vrot.slane %v513, %v517
    %v521 = vsel %vm416, %v30, 0
    %523 = vmatprep.subr.bf16.mxu0 0
    %524 = vmatpush1.bf16.msra.mxu0 0
    %525 = vmatprep.subr.bf16.mxu0 0
    %526 = vmatpush1.bf16.msra.mxu0 0
    %527 = vmatprep.subr.bf16.mxu0 0
    %528 = vmatpush1.bf16.msra.mxu0 0
    %529 = vmatprep.subr.bf16.mxu0 0
    %530 = vmatpush1.bf16.msra.mxu0 0
    %531 = vmatprep.subr.bf16.mxu0 0
    %532 = vmatpush1.bf16.msra.mxu0 0
    %533 = vmatprep.subr.bf16.mxu0 0
    %534 = vmatpush1.bf16.msra.mxu0 0
    %535 = vmatprep.subr.bf16.mxu0 0
    %536 = vmatpush1.bf16.msra.mxu0 0
    %537 = vmatprep.subr.bf16.mxu0 0
    %538 = vmatpush1.bf16.msra.mxu0 %v512
    %539 = vmatprep.subr.bf16.mxu0 0
    %540 = vmatpush2.bf16.msra.mxu0 0
    %541 = vmatprep.subr.bf16.mxu0 0
    %542 = vmatpush2.bf16.msra.mxu0 0
    %543 = vmatprep.subr.bf16.mxu0 0
    %544 = vmatpush2.bf16.msra.mxu0 0
    %545 = vmatprep.subr.bf16.mxu0 0
    %546 = vmatpush2.bf16.msra.mxu0 0
    %547 = vmatprep.subr.bf16.mxu0 0
    %548 = vmatpush2.bf16.msra.mxu0 0
    %549 = vmatprep.subr.bf16.mxu0 0
    %550 = vmatpush2.bf16.msra.mxu0 0
    %551 = vmatprep.subr.bf16.mxu0 0
    %552 = vmatpush2.bf16.msra.mxu0 0
    %553 = vmatprep.subr.bf16.mxu0 0
    %554 = vmatpush2.bf16.msra.mxu0 0
    %555 = vmatprep.mubr.bf16.mxu0 0
    %556 = vmatmul.mubr.bf16.gmra.mxu0 %v521
    %v557 = vpop.f32.mrf.mxu0
    %v558 = vadd.f32 %v518, %v557
    %v559 = vpop.f32.mrf.mxu0
    %v560 = vpop.f32.mrf.mxu0
    %v561 = vadd.f32 %v518, %v560
    %v562 = vpop.f32.mrf.mxu0
    %563 = vdwg.mxu0
    %v564 = vxor.u32 %v558, 2147483648
    %v565 = vxor.u32 %v561, 2147483648
    %v566 = vmul.f32 %v564, 1.442695
    %v567 = vpow.pop %v566
    %v568 = vmul.f32 %v565, 1.442695
    %v569 = vpow.pop %v568
    %v570 = vadd.f32 %v567, 1.0
    %v571 = vadd.f32 %v569, 1.0
    %v572 = vrcp.pop %v570
    %v573 = vmul.f32 1.0, %v572
    %v574 = vrcp.pop %v571
    %v575 = vmul.f32 1.0, %v574
    %v576 = vmul.f32 %v558, %v573
    %v577 = vmul.f32 %v561, %v575
    %vm578 = vcmp.ge.f32.partialorder %v576, -2.5
    %vm579 = vcmp.ge.f32.partialorder %v577, -2.5
    %vm580 = vcmp.lt.f32.partialorder %v576, -2.0
    %vm581 = vcmp.lt.f32.partialorder %v577, -2.0
    %vm582 = vmand %vm578, %vm580
    %vm583 = vmand %vm579, %vm581
    %v584 = vsel %vm582, 1, 0
    %v585 = vsel %vm583, 1, 0
    %v586 = vcvt.s32.f32 %v584
    %v587 = vcvt.s32.f32 %v585
    %vm588 = vcmp.ge.f32.partialorder %v576, -2.0
    %vm589 = vcmp.ge.f32.partialorder %v577, -2.0
    %vm590 = vcmp.lt.f32.partialorder %v576, -1.5
    %vm591 = vcmp.lt.f32.partialorder %v577, -1.5
    %vm592 = vmand %vm588, %vm590
    %vm593 = vmand %vm589, %vm591
    %v594 = vsel %vm592, 1, 0
    %v595 = vsel %vm593, 1, 0
    %v596 = vcvt.s32.f32 %v594
    %v597 = vcvt.s32.f32 %v595
    %vm598 = vcmp.ge.f32.partialorder %v576, -1.5
    %vm599 = vcmp.ge.f32.partialorder %v577, -1.5
    %vm600 = vcmp.lt.f32.partialorder %v576, -1.0
    %vm601 = vcmp.lt.f32.partialorder %v577, -1.0
    %vm602 = vmand %vm598, %vm600
    %vm603 = vmand %vm599, %vm601
    %v604 = vsel %vm602, 1, 0
    %v605 = vsel %vm603, 1, 0
    %v606 = vcvt.s32.f32 %v604
    %v607 = vcvt.s32.f32 %v605
    %vm608 = vcmp.ge.f32.partialorder %v576, -1.0
    %vm609 = vcmp.ge.f32.partialorder %v577, -1.0
    %vm610 = vcmp.lt.f32.partialorder %v576, -0.5
    %vm611 = vcmp.lt.f32.partialorder %v577, -0.5
    %vm612 = vmand %vm608, %vm610
    %vm613 = vmand %vm609, %vm611
    %v614 = vsel %vm612, 1, 0
    %v615 = vsel %vm613, 1, 0
    %v616 = vcvt.s32.f32 %v614
    %v617 = vcvt.s32.f32 %v615
    %vm618 = vcmp.ge.f32.partialorder %v576, -0.5
    %vm619 = vcmp.ge.f32.partialorder %v577, -0.5
    %vm620 = vcmp.lt.f32.partialorder %v576, 0.0
    %vm621 = vcmp.lt.f32.partialorder %v577, 0.0
    %vm622 = vmand %vm618, %vm620
    %vm623 = vmand %vm619, %vm621
    %v624 = vsel %vm622, 1, 0
    %v625 = vsel %vm623, 1, 0
    %v626 = vcvt.s32.f32 %v624
    %v627 = vcvt.s32.f32 %v625
    %vm628 = vcmp.ge.f32.partialorder %v576, 0.0
    %vm629 = vcmp.ge.f32.partialorder %v577, 0.0
    %vm630 = vcmp.lt.f32.partialorder %v576, 0.5
    %vm631 = vcmp.lt.f32.partialorder %v577, 0.5
    %vm632 = vmand %vm628, %vm630
    %vm633 = vmand %vm629, %vm631
    %v634 = vsel %vm632, 1, 0
    %v635 = vsel %vm633, 1, 0
    %v636 = vcvt.s32.f32 %v634
    %v637 = vcvt.s32.f32 %v635
    %vm638 = vcmp.ge.f32.partialorder %v576, 0.5
    %vm639 = vcmp.ge.f32.partialorder %v577, 0.5
    %vm640 = vcmp.lt.f32.partialorder %v576, 1.0
    %vm641 = vcmp.lt.f32.partialorder %v577, 1.0
    %vm642 = vmand %vm638, %vm640
    %vm643 = vmand %vm639, %vm641
    %v644 = vsel %vm642, 1, 0
    %v645 = vsel %vm643, 1, 0
    %v646 = vcvt.s32.f32 %v644
    %v647 = vcvt.s32.f32 %v645
    %vm648 = vcmp.ge.f32.partialorder %v576, 1.0
    %vm649 = vcmp.ge.f32.partialorder %v577, 1.0
    %vm650 = vcmp.lt.f32.partialorder %v576, 1.5
    %vm651 = vcmp.lt.f32.partialorder %v577, 1.5
    %vm652 = vmand %vm648, %vm650
    %vm653 = vmand %vm649, %vm651
    %v654 = vsel %vm652, 1, 0
    %v655 = vsel %vm653, 1, 0
    %v656 = vcvt.s32.f32 %v654
    %v657 = vcvt.s32.f32 %v655
    %vm658 = vcmp.ge.f32.partialorder %v576, 1.5
    %vm659 = vcmp.ge.f32.partialorder %v577, 1.5
    %vm660 = vcmp.lt.f32.partialorder %v576, 2.0
    %vm661 = vcmp.lt.f32.partialorder %v577, 2.0
    %vm662 = vmand %vm658, %vm660
    %vm663 = vmand %vm659, %vm661
    %v664 = vsel %vm662, 1, 0
    %v665 = vsel %vm663, 1, 0
    %v666 = vcvt.s32.f32 %v664
    %v667 = vcvt.s32.f32 %v665
    %vm668 = vcmp.ge.f32.partialorder %v576, 2.0
    %vm669 = vcmp.ge.f32.partialorder %v577, 2.0
    %vm670 = vcmp.lt.f32.partialorder %v576, 2.5
    %vm671 = vcmp.lt.f32.partialorder %v577, 2.5
    %vm672 = vmand %vm668, %vm670
    %vm673 = vmand %vm669, %vm671
    %v674 = vsel %vm672, 1, 0
    %v675 = vsel %vm673, 1, 0
    %v676 = vcvt.s32.f32 %v674
    %v677 = vcvt.s32.f32 %v675
    %v678 = vsub.f32 %v576, -2.5
    %v679 = vsub.f32 %v577, -2.5
    %v680 = vmul.f32 %v678, %v586
    %v681 = vmul.f32 %v679, %v587
    %v682 = vsub.f32 -1.5, %v576
    %v683 = vsub.f32 -1.5, %v577
    %v684 = vmul.f32 %v682, %v596
    %v685 = vmul.f32 %v683, %v597
    %v686 = vadd.f32 %v680, %v684
    %v687 = vadd.f32 %v681, %v685
    %v688 = vmul.f32 %v686, 2.0
    %v689 = vmul.f32 %v687, 2.0
    %v690 = vsub.f32 %v576, -2.0
    %v691 = vsub.f32 %v577, -2.0
    %v692 = vmul.f32 %v690, %v596
    %v693 = vmul.f32 %v691, %v597
    %v694 = vsub.f32 -1.0, %v576
    %v695 = vsub.f32 -1.0, %v577
    %v696 = vmul.f32 %v694, %v606
    %v697 = vmul.f32 %v695, %v607
    %v698 = vadd.f32 %v692, %v696
    %v699 = vadd.f32 %v693, %v697
    %v700 = vmul.f32 %v698, 2.0
    %v701 = vmul.f32 %v699, 2.0
    %v702 = vsub.f32 %v576, -1.5
    %v703 = vsub.f32 %v577, -1.5
    %v704 = vmul.f32 %v702, %v606
    %v705 = vmul.f32 %v703, %v607
    %v706 = vsub.f32 -0.5, %v576
    %v707 = vsub.f32 -0.5, %v577
    %v708 = vmul.f32 %v706, %v616
    %v709 = vmul.f32 %v707, %v617
    %v710 = vadd.f32 %v704, %v708
    %v711 = vadd.f32 %v705, %v709
    %v712 = vmul.f32 %v710, 2.0
    %v713 = vmul.f32 %v711, 2.0
    %v714 = vsub.f32 %v576, -1.0
    %v715 = vsub.f32 %v577, -1.0
    %v716 = vmul.f32 %v714, %v616
    %v717 = vmul.f32 %v715, %v617
    %v718 = vsub.f32 0.0, %v576
    %v719 = vsub.f32 0.0, %v577
    %v720 = vmul.f32 %v718, %v626
    %v721 = vmul.f32 %v719, %v627
    %v722 = vadd.f32 %v716, %v720
    %v723 = vadd.f32 %v717, %v721
    %v724 = vmul.f32 %v722, 2.0
    %v725 = vmul.f32 %v723, 2.0
    %v726 = vsub.f32 %v576, -0.5
    %v727 = vsub.f32 %v577, -0.5
    %v728 = vmul.f32 %v726, %v626
    %v729 = vmul.f32 %v727, %v627
    %v730 = vsub.f32 0.5, %v576
    %v731 = vsub.f32 0.5, %v577
    %v732 = vmul.f32 %v730, %v636
    %v733 = vmul.f32 %v731, %v637
    %v734 = vadd.f32 %v728, %v732
    %v735 = vadd.f32 %v729, %v733
    %v736 = vmul.f32 %v734, 2.0
    %v737 = vmul.f32 %v735, 2.0
    %v738 = vmul.f32 %v576, %v636
    %v739 = vmul.f32 %v577, %v637
    %v740 = vsub.f32 1.0, %v576
    %v741 = vsub.f32 1.0, %v577
    %v742 = vmul.f32 %v740, %v646
    %v743 = vmul.f32 %v741, %v647
    %v744 = vadd.f32 %v738, %v742
    %v745 = vadd.f32 %v739, %v743
    %v746 = vmul.f32 %v744, 2.0
    %v747 = vmul.f32 %v745, 2.0
    %v748 = vsub.f32 %v576, 0.5
    %v749 = vsub.f32 %v577, 0.5
    %v750 = vmul.f32 %v748, %v646
    %v751 = vmul.f32 %v749, %v647
    %v752 = vsub.f32 1.5, %v576
    %v753 = vsub.f32 1.5, %v577
    %v754 = vmul.f32 %v752, %v656
    %v755 = vmul.f32 %v753, %v657
    %v756 = vadd.f32 %v750, %v754
    %v757 = vadd.f32 %v751, %v755
    %v758 = vmul.f32 %v756, 2.0
    %v759 = vmul.f32 %v757, 2.0
    %v760 = vsub.f32 %v576, 1.0
    %v761 = vsub.f32 %v577, 1.0
    %v762 = vmul.f32 %v760, %v656
    %v763 = vmul.f32 %v761, %v657
    %v764 = vsub.f32 2.0, %v576
    %v765 = vsub.f32 2.0, %v577
    %v766 = vmul.f32 %v764, %v666
    %v767 = vmul.f32 %v765, %v667
    %v768 = vadd.f32 %v762, %v766
    %v769 = vadd.f32 %v763, %v767
    %v770 = vmul.f32 %v768, 2.0
    %v771 = vmul.f32 %v769, 2.0
    %v772 = vsub.f32 %v576, 1.5
    %v773 = vsub.f32 %v577, 1.5
    %v774 = vmul.f32 %v772, %v666
    %v775 = vmul.f32 %v773, %v667
    %v776 = vsub.f32 2.5, %v576
    %v777 = vsub.f32 2.5, %v577
    %v778 = vmul.f32 %v776, %v676
    %v779 = vmul.f32 %v777, %v677
    %v780 = vadd.f32 %v774, %v778
    %v781 = vadd.f32 %v775, %v779
    %v782 = vmul.f32 %v780, 2.0
    %v783 = vmul.f32 %v781, 2.0
    %v784 = vmul.f32 %v678, %v688
    %v785 = vmul.f32 %v679, %v689
    %v786 = vmul.f32 %v694, %v700
    %v787 = vmul.f32 %v695, %v701
    %v788 = vadd.f32 %v784, %v786
    %v789 = vadd.f32 %v785, %v787
    %v790 = vmul.f32 %v690, %v700
    %v791 = vmul.f32 %v691, %v701
    %v792 = vmul.f32 %v706, %v712
    %v793 = vmul.f32 %v707, %v713
    %v794 = vadd.f32 %v790, %v792
    %v795 = vadd.f32 %v791, %v793
    %v796 = vmul.f32 %v702, %v712
    %v797 = vmul.f32 %v703, %v713
    %v798 = vmul.f32 %v718, %v724
    %v799 = vmul.f32 %v719, %v725
    %v800 = vadd.f32 %v796, %v798
    %v801 = vadd.f32 %v797, %v799
    %v802 = vmul.f32 %v714, %v724
    %v803 = vmul.f32 %v715, %v725
    %v804 = vmul.f32 %v730, %v736
    %v805 = vmul.f32 %v731, %v737
    %v806 = vadd.f32 %v802, %v804
    %v807 = vadd.f32 %v803, %v805
    %v808 = vmul.f32 %v726, %v736
    %v809 = vmul.f32 %v727, %v737
    %v810 = vmul.f32 %v740, %v746
    %v811 = vmul.f32 %v741, %v747
    %v812 = vadd.f32 %v808, %v810
    %v813 = vadd.f32 %v809, %v811
    %v814 = vmul.f32 %v576, %v746
    %v815 = vmul.f32 %v577, %v747
    %v816 = vmul.f32 %v752, %v758
    %v817 = vmul.f32 %v753, %v759
    %v818 = vadd.f32 %v814, %v816
    %v819 = vadd.f32 %v815, %v817
    %v820 = vmul.f32 %v748, %v758
    %v821 = vmul.f32 %v749, %v759
    %v822 = vmul.f32 %v764, %v770
    %v823 = vmul.f32 %v765, %v771
    %v824 = vadd.f32 %v820, %v822
    %v825 = vadd.f32 %v821, %v823
    %v826 = vmul.f32 %v760, %v770
    %v827 = vmul.f32 %v761, %v771
    %v828 = vmul.f32 %v776, %v782
    %v829 = vmul.f32 %v777, %v783
    %v830 = vadd.f32 %v826, %v828
    %v831 = vadd.f32 %v827, %v829
    %v832 = vmul.f32 %v678, %v788
    %v833 = vmul.f32 %v679, %v789
    %v834 = vmul.f32 %v706, %v794
    %v835 = vmul.f32 %v707, %v795
    %v836 = vadd.f32 %v832, %v834
    %v837 = vadd.f32 %v833, %v835
    %v838 = vmul.f32 %v836, 0.6666667
    %v839 = vmul.f32 %v837, 0.6666667
    %v840 = vmul.f32 %v690, %v794
    %v841 = vmul.f32 %v691, %v795
    %v842 = vmul.f32 %v718, %v800
    %v843 = vmul.f32 %v719, %v801
    %v844 = vadd.f32 %v840, %v842
    %v845 = vadd.f32 %v841, %v843
    %v846 = vmul.f32 %v844, 0.6666667
    %v847 = vmul.f32 %v845, 0.6666667
    %v848 = vmul.f32 %v702, %v800
    %v849 = vmul.f32 %v703, %v801
    %v850 = vmul.f32 %v730, %v806
    %v851 = vmul.f32 %v731, %v807
    %v852 = vadd.f32 %v848, %v850
    %v853 = vadd.f32 %v849, %v851
    %v854 = vmul.f32 %v852, 0.6666667
    %v855 = vmul.f32 %v853, 0.6666667
    %v856 = vmul.f32 %v714, %v806
    %v857 = vmul.f32 %v715, %v807
    %v858 = vmul.f32 %v740, %v812
    %v859 = vmul.f32 %v741, %v813
    %v860 = vadd.f32 %v856, %v858
    %v861 = vadd.f32 %v857, %v859
    %v862 = vmul.f32 %v860, 0.6666667
    %v863 = vmul.f32 %v861, 0.6666667
    %v864 = vmul.f32 %v726, %v812
    %v865 = vmul.f32 %v727, %v813
    %v866 = vmul.f32 %v752, %v818
    %v867 = vmul.f32 %v753, %v819
    %v868 = vadd.f32 %v864, %v866
    %v869 = vadd.f32 %v865, %v867
    %v870 = vmul.f32 %v868, 0.6666667
    %v871 = vmul.f32 %v869, 0.6666667
    %v872 = vmul.f32 %v576, %v818
    %v873 = vmul.f32 %v577, %v819
    %v874 = vmul.f32 %v764, %v824
    %v875 = vmul.f32 %v765, %v825
    %v876 = vadd.f32 %v872, %v874
    %v877 = vadd.f32 %v873, %v875
    %v878 = vmul.f32 %v876, 0.6666667
    %v879 = vmul.f32 %v877, 0.6666667
    %v880 = vmul.f32 %v748, %v824
    %v881 = vmul.f32 %v749, %v825
    %v882 = vmul.f32 %v776, %v830
    %v883 = vmul.f32 %v777, %v831
    %v884 = vadd.f32 %v880, %v882
    %v885 = vadd.f32 %v881, %v883
    %v886 = vmul.f32 %v884, 0.6666667
    %v887 = vmul.f32 %v885, 0.6666667
    %v888 = vxor.u32 %v576, 2147483648
    %v889 = vxor.u32 %v577, 2147483648
    %v890 = vmul.f32 %v888, 1.442695
    %v891 = vpow.pop %v890
    %v892 = vmul.f32 %v889, 1.442695
    %v893 = vpow.pop %v892
    %v894 = vadd.f32 %v891, 1.0
    %v895 = vadd.f32 %v893, 1.0
    %v896 = vrcp.pop %v894
    %v897 = vmul.f32 1.0, %v896
    %v898 = vrcp.pop %v895
    %v899 = vmul.f32 1.0, %v898
    %v900 = vmul.f32 %v576, %v897
    %v901 = vmul.f32 %v577, %v899
    %904 = vrot.lane.b32.xlu0 %v838, 32
    %v905 = vpop.permute.xlu0 %904
    %906 = vrot.lane.b32.xlu0 %v839, 32
    %v907 = vpop.permute.xlu0 %906
    %912 = vrot.lane.b32.xlu0 %v846, 64
    %v913 = vpop.permute.xlu0 %912
    %914 = vrot.lane.b32.xlu0 %v847, 64
    %v915 = vpop.permute.xlu0 %914
    %920 = vrot.lane.b32.xlu0 %v854, 96
    %v921 = vpop.permute.xlu0 %920
    %922 = vrot.lane.b32.xlu0 %v855, 96
    %v923 = vpop.permute.xlu0 %922
    %928 = vrot.lane.b32.xlu0 %v870, 32
    %v929 = vpop.permute.xlu0 %928
    %930 = vrot.lane.b32.xlu0 %v871, 32
    %v931 = vpop.permute.xlu0 %930
    %936 = vrot.lane.b32.xlu0 %v878, 64
    %v937 = vpop.permute.xlu0 %936
    %938 = vrot.lane.b32.xlu0 %v879, 64
    %v939 = vpop.permute.xlu0 %938
    %944 = vrot.lane.b32.xlu0 %v886, 96
    %v945 = vpop.permute.xlu0 %944
    %946 = vrot.lane.b32.xlu0 %v887, 96
    %v947 = vpop.permute.xlu0 %946
    %v950 = vsel %vm422, %v900, %v905
    %v951 = vsel %vm422, %v901, %v907
    %v952 = vsel %vm467, %v950, %v913
    %v953 = vsel %vm467, %v951, %v915
    %vm954 = vcmask 785408
    %v955 = vsel %vm954, %v952, %v921
    %v956 = vsel %vm954, %v953, %v923
    %v957 = vsel %vm422, %v862, %v929
    %v958 = vsel %vm422, %v863, %v931
    %v959 = vsel %vm467, %v957, %v937
    %v960 = vsel %vm467, %v958, %v939
    %v961 = vsel %vm954, %v959, %v945
    %v962 = vsel %vm954, %v960, %v947
    %v963 = vpack.c.bf16 %v956, %v955
    %v964 = vpack.c.bf16 %v962, %v961
    %v965 = vld [vmem:[%s4] sm:$0xf]
    %v966 = vld [vmem:[%s4 + $0x4] sm:$0xf]
    %v967 = vld [vmem:[%s4 + $0x8] sm:$0xf]
    %v968 = vld [vmem:[%s4 + $0xc] sm:$0xf]
    %v969 = vld [vmem:[%s4 + $0x10] sm:$0xf]
    %v970 = vld [vmem:[%s4 + $0x14] sm:$0xf]
    %v971 = vld [vmem:[%s4 + $0x18] sm:$0xf]
    %v972 = vld [vmem:[%s4 + $0x1c] sm:$0xf]
    %v973 = vld [vmem:[%s4 + $0x20] sm:$0xf]
    %v974 = vld [vmem:[%s4 + $0x24] sm:$0xf]
    %v975 = vld [vmem:[%s4 + $0x28] sm:$0xf]
    %v976 = vld [vmem:[%s4 + $0x2c] sm:$0xf]
    %v977 = vld [vmem:[%s4 + $0x30] sm:$0xf]
    %v978 = vld [vmem:[%s4 + $0x34] sm:$0xf]
    %v979 = vld [vmem:[%s4 + $0x38] sm:$0xf]
    %v980 = vld [vmem:[%s4 + $0x3c] sm:$0xf]
    %v981 = vld [vmem:[%s4 + $0x40] sm:$0xf]
    %v982 = vld [vmem:[%s4 + $0x44] sm:$0xf]
    %v983 = vld [vmem:[%s4 + $0x48] sm:$0xf]
    %v984 = vld [vmem:[%s4 + $0x4c] sm:$0xf]
    %v985 = vld [vmem:[%s4 + $0x50] sm:$0xf]
    %v986 = vld [vmem:[%s4 + $0x54] sm:$0xf]
    %v987 = vld [vmem:[%s4 + $0x58] sm:$0xf]
    %v988 = vld [vmem:[%s4 + $0x5c] sm:$0xf]
    %v989 = vld [vmem:[%s4 + $0x60] sm:$0xf]
    %v990 = vld [vmem:[%s4 + $0x64] sm:$0xf]
    %v991 = vld [vmem:[%s4 + $0x68] sm:$0xf]
    %v992 = vld [vmem:[%s4 + $0x6c] sm:$0xf]
    %v993 = vld [vmem:[%s4 + $0x70] sm:$0xf]
    %v994 = vld [vmem:[%s4 + $0x74] sm:$0xf]
    %v995 = vld [vmem:[%s4 + $0x78] sm:$0xf]
    %v996 = vld [vmem:[%s4 + $0x7c] sm:$0xf]
    %v1029 = vunpack.c.l.b16 %v965
    %v1030 = vunpack.c.l.b16 %v966
    %v1031 = vunpack.c.l.b16 %v967
    %v1032 = vunpack.c.l.b16 %v968
    %v1033 = vunpack.c.l.b16 %v969
    %v1034 = vunpack.c.l.b16 %v970
    %v1035 = vunpack.c.l.b16 %v971
    %v1036 = vunpack.c.l.b16 %v972
    %v1037 = vunpack.c.l.b16 %v973
    %v1038 = vunpack.c.l.b16 %v974
    %v1039 = vunpack.c.l.b16 %v975
    %v1040 = vunpack.c.l.b16 %v976
    %v1041 = vunpack.c.l.b16 %v977
    %v1042 = vunpack.c.l.b16 %v978
    %v1043 = vunpack.c.l.b16 %v979
    %v1044 = vunpack.c.l.b16 %v980
    %v1045 = vunpack.c.l.b16 %v981
    %v1046 = vunpack.c.l.b16 %v982
    %v1047 = vunpack.c.l.b16 %v983
    %v1048 = vunpack.c.l.b16 %v984
    %v1049 = vunpack.c.l.b16 %v985
    %v1050 = vunpack.c.l.b16 %v986
    %v1051 = vunpack.c.l.b16 %v987
    %v1052 = vunpack.c.l.b16 %v988
    %v1053 = vunpack.c.l.b16 %v989
    %v1054 = vunpack.c.l.b16 %v990
    %v1055 = vunpack.c.l.b16 %v991
    %v1056 = vunpack.c.l.b16 %v992
    %v1057 = vunpack.c.l.b16 %v993
    %v1058 = vunpack.c.l.b16 %v994
    %v1059 = vunpack.c.l.b16 %v995
    %v1060 = vunpack.c.l.b16 %v996
    %v1061 = vpack.c.b16 %v1030, %v1029
    %v1062 = vpack.c.b16 %v1032, %v1031
    %v1063 = vpack.c.b16 %v1034, %v1033
    %v1064 = vpack.c.b16 %v1036, %v1035
    %v1065 = vpack.c.b16 %v1038, %v1037
    %v1066 = vpack.c.b16 %v1040, %v1039
    %v1067 = vpack.c.b16 %v1042, %v1041
    %v1068 = vpack.c.b16 %v1044, %v1043
    %v1069 = vpack.c.b16 %v1046, %v1045
    %v1070 = vpack.c.b16 %v1048, %v1047
    %v1071 = vpack.c.b16 %v1050, %v1049
    %v1072 = vpack.c.b16 %v1052, %v1051
    %v1073 = vpack.c.b16 %v1054, %v1053
    %v1074 = vpack.c.b16 %v1056, %v1055
    %v1075 = vpack.c.b16 %v1058, %v1057
    %v1076 = vpack.c.b16 %v1060, %v1059
    %1093 = vmatprep.subr.bf16.mxu0 0
    %1094 = vmatpush1.bf16.msra.mxu0 %v1068
    %1095 = vmatprep.subr.bf16.mxu0 0
    %1096 = vmatpush1.bf16.msra.mxu0 %v1067
    %1097 = vmatprep.subr.bf16.mxu0 0
    %1098 = vmatpush1.bf16.msra.mxu0 %v1066
    %1099 = vmatprep.subr.bf16.mxu0 0
    %1100 = vmatpush1.bf16.msra.mxu0 %v1065
    %1101 = vmatprep.subr.bf16.mxu0 0
    %1102 = vmatpush1.bf16.msra.mxu0 %v1064
    %1103 = vmatprep.subr.bf16.mxu0 0
    %1104 = vmatpush1.bf16.msra.mxu0 %v1063
    %1105 = vmatprep.subr.bf16.mxu0 0
    %1106 = vmatpush1.bf16.msra.mxu0 %v1062
    %1107 = vmatprep.subr.bf16.mxu0 0
    %1108 = vmatpush1.bf16.msra.mxu0 %v1061
    %1109 = vmatprep.subr.bf16.mxu0 0
    %1110 = vmatpush2.bf16.msra.mxu0 %v1076
    %1111 = vmatprep.subr.bf16.mxu0 0
    %1112 = vmatpush2.bf16.msra.mxu0 %v1075
    %1113 = vmatprep.subr.bf16.mxu0 0
    %1114 = vmatpush2.bf16.msra.mxu0 %v1074
    %1115 = vmatprep.subr.bf16.mxu0 0
    %1116 = vmatpush2.bf16.msra.mxu0 %v1073
    %1117 = vmatprep.subr.bf16.mxu0 0
    %1118 = vmatpush2.bf16.msra.mxu0 %v1072
    %1119 = vmatprep.subr.bf16.mxu0 0
    %1120 = vmatpush2.bf16.msra.mxu0 %v1071
    %1121 = vmatprep.subr.bf16.mxu0 0
    %1122 = vmatpush2.bf16.msra.mxu0 %v1070
    %1123 = vmatprep.subr.bf16.mxu0 0
    %1124 = vmatpush2.bf16.msra.mxu0 %v1069
    %1125 = vmatprep.mubr.bf16.mxu0 %v964
    %1126 = vmatmul.mubr.bf16.gmra.mxu0 %v963
    %v1127 = vpop.f32.mrf.mxu0
    %v1128 = vadd.f32 0.0, %v1127
    %v1129 = vpop.f32.mrf.mxu0
    %v1130 = vpop.f32.mrf.mxu0
    %v1131 = vadd.f32 0.0, %v1130
    %v1132 = vpop.f32.mrf.mxu0
    %1133 = vdwg.mxu0
    %v1134 = vpack.c.bf16 %v1131, %v1128
    %v1135 = vld [vmem:[%s5] sm:$0x1]
    %v1137 = vlaneseq
    %v1138 = vshrl.u32 %v1137, 7
    %v1139 = vsub.s32 0, %v1138
    %v1140 = vrot.slane %v1135, %v1139
    %1142 = vmatprep.subr.bf16.mxu0 0
    %1143 = vmatpush1.bf16.msra.mxu0 0
    %1144 = vmatprep.subr.bf16.mxu0 0
    %1145 = vmatpush1.bf16.msra.mxu0 0
    %1146 = vmatprep.subr.bf16.mxu0 0
    %1147 = vmatpush1.bf16.msra.mxu0 0
    %1148 = vmatprep.subr.bf16.mxu0 0
    %1149 = vmatpush1.bf16.msra.mxu0 0
    %1150 = vmatprep.subr.bf16.mxu0 0
    %1151 = vmatpush1.bf16.msra.mxu0 0
    %1152 = vmatprep.subr.bf16.mxu0 0
    %1153 = vmatpush1.bf16.msra.mxu0 0
    %1154 = vmatprep.subr.bf16.mxu0 0
    %1155 = vmatpush1.bf16.msra.mxu0 0
    %1156 = vmatprep.subr.bf16.mxu0 0
    %1157 = vmatpush1.bf16.msra.mxu0 %v1134
    %1158 = vmatprep.subr.bf16.mxu0 0
    %1159 = vmatpush2.bf16.msra.mxu0 0
    %1160 = vmatprep.subr.bf16.mxu0 0
    %1161 = vmatpush2.bf16.msra.mxu0 0
    %1162 = vmatprep.subr.bf16.mxu0 0
    %1163 = vmatpush2.bf16.msra.mxu0 0
    %1164 = vmatprep.subr.bf16.mxu0 0
    %1165 = vmatpush2.bf16.msra.mxu0 0
    %1166 = vmatprep.subr.bf16.mxu0 0
    %1167 = vmatpush2.bf16.msra.mxu0 0
    %1168 = vmatprep.subr.bf16.mxu0 0
    %1169 = vmatpush2.bf16.msra.mxu0 0
    %1170 = vmatprep.subr.bf16.mxu0 0
    %1171 = vmatpush2.bf16.msra.mxu0 0
    %1172 = vmatprep.subr.bf16.mxu0 0
    %1173 = vmatpush2.bf16.msra.mxu0 0
    %1174 = vmatprep.mubr.bf16.mxu0 0
    %1175 = vmatmul.mubr.bf16.gmra.mxu0 %v521
    %v1176 = vpop.f32.mrf.mxu0
    %v1177 = vadd.f32 %v1140, %v1176
    %v1178 = vpop.f32.mrf.mxu0
    %v1179 = vpop.f32.mrf.mxu0
    %v1180 = vadd.f32 %v1140, %v1179
    %v1181 = vpop.f32.mrf.mxu0
    %1182 = vdwg.mxu0
    %v1183 = vxor.u32 %v1177, 2147483648
    %v1184 = vxor.u32 %v1180, 2147483648
    %v1185 = vmul.f32 %v1183, 1.442695
    %v1186 = vpow.pop %v1185
    %v1187 = vmul.f32 %v1184, 1.442695
    %v1188 = vpow.pop %v1187
    %v1189 = vadd.f32 %v1186, 1.0
    %v1190 = vadd.f32 %v1188, 1.0
    %v1191 = vrcp.pop %v1189
    %v1192 = vmul.f32 1.0, %v1191
    %v1193 = vrcp.pop %v1190
    %v1194 = vmul.f32 1.0, %v1193
    %v1195 = vmul.f32 %v1177, %v1192
    %v1196 = vmul.f32 %v1180, %v1194
    %vm1197 = vcmp.ge.f32.partialorder %v1195, -2.5
    %vm1198 = vcmp.ge.f32.partialorder %v1196, -2.5
    %vm1199 = vcmp.lt.f32.partialorder %v1195, -2.0
    %vm1200 = vcmp.lt.f32.partialorder %v1196, -2.0
    %vm1201 = vmand %vm1197, %vm1199
    %vm1202 = vmand %vm1198, %vm1200
    %v1203 = vsel %vm1201, 1, 0
    %v1204 = vsel %vm1202, 1, 0
    %v1205 = vcvt.s32.f32 %v1203
    %v1206 = vcvt.s32.f32 %v1204
    %vm1207 = vcmp.ge.f32.partialorder %v1195, -2.0
    %vm1208 = vcmp.ge.f32.partialorder %v1196, -2.0
    %vm1209 = vcmp.lt.f32.partialorder %v1195, -1.5
    %vm1210 = vcmp.lt.f32.partialorder %v1196, -1.5
    %vm1211 = vmand %vm1207, %vm1209
    %vm1212 = vmand %vm1208, %vm1210
    %v1213 = vsel %vm1211, 1, 0
    %v1214 = vsel %vm1212, 1, 0
    %v1215 = vcvt.s32.f32 %v1213
    %v1216 = vcvt.s32.f32 %v1214
    %vm1217 = vcmp.ge.f32.partialorder %v1195, -1.5
    %vm1218 = vcmp.ge.f32.partialorder %v1196, -1.5
    %vm1219 = vcmp.lt.f32.partialorder %v1195, -1.0
    %vm1220 = vcmp.lt.f32.partialorder %v1196, -1.0
    %vm1221 = vmand %vm1217, %vm1219
    %vm1222 = vmand %vm1218, %vm1220
    %v1223 = vsel %vm1221, 1, 0
    %v1224 = vsel %vm1222, 1, 0
    %v1225 = vcvt.s32.f32 %v1223
    %v1226 = vcvt.s32.f32 %v1224
    %vm1227 = vcmp.ge.f32.partialorder %v1195, -1.0
    %vm1228 = vcmp.ge.f32.partialorder %v1196, -1.0
    %vm1229 = vcmp.lt.f32.partialorder %v1195, -0.5
    %vm1230 = vcmp.lt.f32.partialorder %v1196, -0.5
    %vm1231 = vmand %vm1227, %vm1229
    %vm1232 = vmand %vm1228, %vm1230
    %v1233 = vsel %vm1231, 1, 0
    %v1234 = vsel %vm1232, 1, 0
    %v1235 = vcvt.s32.f32 %v1233
    %v1236 = vcvt.s32.f32 %v1234
    %vm1237 = vcmp.ge.f32.partialorder %v1195, -0.5
    %vm1238 = vcmp.ge.f32.partialorder %v1196, -0.5
    %vm1239 = vcmp.lt.f32.partialorder %v1195, 0.0
    %vm1240 = vcmp.lt.f32.partialorder %v1196, 0.0
    %vm1241 = vmand %vm1237, %vm1239
    %vm1242 = vmand %vm1238, %vm1240
    %v1243 = vsel %vm1241, 1, 0
    %v1244 = vsel %vm1242, 1, 0
    %v1245 = vcvt.s32.f32 %v1243
    %v1246 = vcvt.s32.f32 %v1244
    %vm1247 = vcmp.ge.f32.partialorder %v1195, 0.0
    %vm1248 = vcmp.ge.f32.partialorder %v1196, 0.0
    %vm1249 = vcmp.lt.f32.partialorder %v1195, 0.5
    %vm1250 = vcmp.lt.f32.partialorder %v1196, 0.5
    %vm1251 = vmand %vm1247, %vm1249
    %vm1252 = vmand %vm1248, %vm1250
    %v1253 = vsel %vm1251, 1, 0
    %v1254 = vsel %vm1252, 1, 0
    %v1255 = vcvt.s32.f32 %v1253
    %v1256 = vcvt.s32.f32 %v1254
    %vm1257 = vcmp.ge.f32.partialorder %v1195, 0.5
    %vm1258 = vcmp.ge.f32.partialorder %v1196, 0.5
    %vm1259 = vcmp.lt.f32.partialorder %v1195, 1.0
    %vm1260 = vcmp.lt.f32.partialorder %v1196, 1.0
    %vm1261 = vmand %vm1257, %vm1259
    %vm1262 = vmand %vm1258, %vm1260
    %v1263 = vsel %vm1261, 1, 0
    %v1264 = vsel %vm1262, 1, 0
    %v1265 = vcvt.s32.f32 %v1263
    %v1266 = vcvt.s32.f32 %v1264
    %vm1267 = vcmp.ge.f32.partialorder %v1195, 1.0
    %vm1268 = vcmp.ge.f32.partialorder %v1196, 1.0
    %vm1269 = vcmp.lt.f32.partialorder %v1195, 1.5
    %vm1270 = vcmp.lt.f32.partialorder %v1196, 1.5
    %vm1271 = vmand %vm1267, %vm1269
    %vm1272 = vmand %vm1268, %vm1270
    %v1273 = vsel %vm1271, 1, 0
    %v1274 = vsel %vm1272, 1, 0
    %v1275 = vcvt.s32.f32 %v1273
    %v1276 = vcvt.s32.f32 %v1274
    %vm1277 = vcmp.ge.f32.partialorder %v1195, 1.5
    %vm1278 = vcmp.ge.f32.partialorder %v1196, 1.5
    %vm1279 = vcmp.lt.f32.partialorder %v1195, 2.0
    %vm1280 = vcmp.lt.f32.partialorder %v1196, 2.0
    %vm1281 = vmand %vm1277, %vm1279
    %vm1282 = vmand %vm1278, %vm1280
    %v1283 = vsel %vm1281, 1, 0
    %v1284 = vsel %vm1282, 1, 0
    %v1285 = vcvt.s32.f32 %v1283
    %v1286 = vcvt.s32.f32 %v1284
    %vm1287 = vcmp.ge.f32.partialorder %v1195, 2.0
    %vm1288 = vcmp.ge.f32.partialorder %v1196, 2.0
    %vm1289 = vcmp.lt.f32.partialorder %v1195, 2.5
    %vm1290 = vcmp.lt.f32.partialorder %v1196, 2.5
    %vm1291 = vmand %vm1287, %vm1289
    %vm1292 = vmand %vm1288, %vm1290
    %v1293 = vsel %vm1291, 1, 0
    %v1294 = vsel %vm1292, 1, 0
    %v1295 = vcvt.s32.f32 %v1293
    %v1296 = vcvt.s32.f32 %v1294
    %v1297 = vsub.f32 %v1195, -2.5
    %v1298 = vsub.f32 %v1196, -2.5
    %v1299 = vmul.f32 %v1297, %v1205
    %v1300 = vmul.f32 %v1298, %v1206
    %v1301 = vsub.f32 -1.5, %v1195
    %v1302 = vsub.f32 -1.5, %v1196
    %v1303 = vmul.f32 %v1301, %v1215
    %v1304 = vmul.f32 %v1302, %v1216
    %v1305 = vadd.f32 %v1299, %v1303
    %v1306 = vadd.f32 %v1300, %v1304
    %v1307 = vmul.f32 %v1305, 2.0
    %v1308 = vmul.f32 %v1306, 2.0
    %v1309 = vsub.f32 %v1195, -2.0
    %v1310 = vsub.f32 %v1196, -2.0
    %v1311 = vmul.f32 %v1309, %v1215
    %v1312 = vmul.f32 %v1310, %v1216
    %v1313 = vsub.f32 -1.0, %v1195
    %v1314 = vsub.f32 -1.0, %v1196
    %v1315 = vmul.f32 %v1313, %v1225
    %v1316 = vmul.f32 %v1314, %v1226
    %v1317 = vadd.f32 %v1311, %v1315
    %v1318 = vadd.f32 %v1312, %v1316
    %v1319 = vmul.f32 %v1317, 2.0
    %v1320 = vmul.f32 %v1318, 2.0
    %v1321 = vsub.f32 %v1195, -1.5
    %v1322 = vsub.f32 %v1196, -1.5
    %v1323 = vmul.f32 %v1321, %v1225
    %v1324 = vmul.f32 %v1322, %v1226
    %v1325 = vsub.f32 -0.5, %v1195
    %v1326 = vsub.f32 -0.5, %v1196
    %v1327 = vmul.f32 %v1325, %v1235
    %v1328 = vmul.f32 %v1326, %v1236
    %v1329 = vadd.f32 %v1323, %v1327
    %v1330 = vadd.f32 %v1324, %v1328
    %v1331 = vmul.f32 %v1329, 2.0
    %v1332 = vmul.f32 %v1330, 2.0
    %v1333 = vsub.f32 %v1195, -1.0
    %v1334 = vsub.f32 %v1196, -1.0
    %v1335 = vmul.f32 %v1333, %v1235
    %v1336 = vmul.f32 %v1334, %v1236
    %v1337 = vsub.f32 0.0, %v1195
    %v1338 = vsub.f32 0.0, %v1196
    %v1339 = vmul.f32 %v1337, %v1245
    %v1340 = vmul.f32 %v1338, %v1246
    %v1341 = vadd.f32 %v1335, %v1339
    %v1342 = vadd.f32 %v1336, %v1340
    %v1343 = vmul.f32 %v1341, 2.0
    %v1344 = vmul.f32 %v1342, 2.0
    %v1345 = vsub.f32 %v1195, -0.5
    %v1346 = vsub.f32 %v1196, -0.5
    %v1347 = vmul.f32 %v1345, %v1245
    %v1348 = vmul.f32 %v1346, %v1246
    %v1349 = vsub.f32 0.5, %v1195
    %v1350 = vsub.f32 0.5, %v1196
    %v1351 = vmul.f32 %v1349, %v1255
    %v1352 = vmul.f32 %v1350, %v1256
    %v1353 = vadd.f32 %v1347, %v1351
    %v1354 = vadd.f32 %v1348, %v1352
    %v1355 = vmul.f32 %v1353, 2.0
    %v1356 = vmul.f32 %v1354, 2.0
    %v1357 = vmul.f32 %v1195, %v1255
    %v1358 = vmul.f32 %v1196, %v1256
    %v1359 = vsub.f32 1.0, %v1195
    %v1360 = vsub.f32 1.0, %v1196
    %v1361 = vmul.f32 %v1359, %v1265
    %v1362 = vmul.f32 %v1360, %v1266
    %v1363 = vadd.f32 %v1357, %v1361
    %v1364 = vadd.f32 %v1358, %v1362
    %v1365 = vmul.f32 %v1363, 2.0
    %v1366 = vmul.f32 %v1364, 2.0
    %v1367 = vsub.f32 %v1195, 0.5
    %v1368 = vsub.f32 %v1196, 0.5
    %v1369 = vmul.f32 %v1367, %v1265
    %v1370 = vmul.f32 %v1368, %v1266
    %v1371 = vsub.f32 1.5, %v1195
    %v1372 = vsub.f32 1.5, %v1196
    %v1373 = vmul.f32 %v1371, %v1275
    %v1374 = vmul.f32 %v1372, %v1276
    %v1375 = vadd.f32 %v1369, %v1373
    %v1376 = vadd.f32 %v1370, %v1374
    %v1377 = vmul.f32 %v1375, 2.0
    %v1378 = vmul.f32 %v1376, 2.0
    %v1379 = vsub.f32 %v1195, 1.0
    %v1380 = vsub.f32 %v1196, 1.0
    %v1381 = vmul.f32 %v1379, %v1275
    %v1382 = vmul.f32 %v1380, %v1276
    %v1383 = vsub.f32 2.0, %v1195
    %v1384 = vsub.f32 2.0, %v1196
    %v1385 = vmul.f32 %v1383, %v1285
    %v1386 = vmul.f32 %v1384, %v1286
    %v1387 = vadd.f32 %v1381, %v1385
    %v1388 = vadd.f32 %v1382, %v1386
    %v1389 = vmul.f32 %v1387, 2.0
    %v1390 = vmul.f32 %v1388, 2.0
    %v1391 = vsub.f32 %v1195, 1.5
    %v1392 = vsub.f32 %v1196, 1.5
    %v1393 = vmul.f32 %v1391, %v1285
    %v1394 = vmul.f32 %v1392, %v1286
    %v1395 = vsub.f32 2.5, %v1195
    %v1396 = vsub.f32 2.5, %v1196
    %v1397 = vmul.f32 %v1395, %v1295
    %v1398 = vmul.f32 %v1396, %v1296
    %v1399 = vadd.f32 %v1393, %v1397
    %v1400 = vadd.f32 %v1394, %v1398
    %v1401 = vmul.f32 %v1399, 2.0
    %v1402 = vmul.f32 %v1400, 2.0
    %v1403 = vmul.f32 %v1297, %v1307
    %v1404 = vmul.f32 %v1298, %v1308
    %v1405 = vmul.f32 %v1313, %v1319
    %v1406 = vmul.f32 %v1314, %v1320
    %v1407 = vadd.f32 %v1403, %v1405
    %v1408 = vadd.f32 %v1404, %v1406
    %v1409 = vmul.f32 %v1309, %v1319
    %v1410 = vmul.f32 %v1310, %v1320
    %v1411 = vmul.f32 %v1325, %v1331
    %v1412 = vmul.f32 %v1326, %v1332
    %v1413 = vadd.f32 %v1409, %v1411
    %v1414 = vadd.f32 %v1410, %v1412
    %v1415 = vmul.f32 %v1321, %v1331
    %v1416 = vmul.f32 %v1322, %v1332
    %v1417 = vmul.f32 %v1337, %v1343
    %v1418 = vmul.f32 %v1338, %v1344
    %v1419 = vadd.f32 %v1415, %v1417
    %v1420 = vadd.f32 %v1416, %v1418
    %v1421 = vmul.f32 %v1333, %v1343
    %v1422 = vmul.f32 %v1334, %v1344
    %v1423 = vmul.f32 %v1349, %v1355
    %v1424 = vmul.f32 %v1350, %v1356
    %v1425 = vadd.f32 %v1421, %v1423
    %v1426 = vadd.f32 %v1422, %v1424
    %v1427 = vmul.f32 %v1345, %v1355
    %v1428 = vmul.f32 %v1346, %v1356
    %v1429 = vmul.f32 %v1359, %v1365
    %v1430 = vmul.f32 %v1360, %v1366
    %v1431 = vadd.f32 %v1427, %v1429
    %v1432 = vadd.f32 %v1428, %v1430
    %v1433 = vmul.f32 %v1195, %v1365
    %v1434 = vmul.f32 %v1196, %v1366
    %v1435 = vmul.f32 %v1371, %v1377
    %v1436 = vmul.f32 %v1372, %v1378
    %v1437 = vadd.f32 %v1433, %v1435
    %v1438 = vadd.f32 %v1434, %v1436
    %v1439 = vmul.f32 %v1367, %v1377
    %v1440 = vmul.f32 %v1368, %v1378
    %v1441 = vmul.f32 %v1383, %v1389
    %v1442 = vmul.f32 %v1384, %v1390
    %v1443 = vadd.f32 %v1439, %v1441
    %v1444 = vadd.f32 %v1440, %v1442
    %v1445 = vmul.f32 %v1379, %v1389
    %v1446 = vmul.f32 %v1380, %v1390
    %v1447 = vmul.f32 %v1395, %v1401
    %v1448 = vmul.f32 %v1396, %v1402
    %v1449 = vadd.f32 %v1445, %v1447
    %v1450 = vadd.f32 %v1446, %v1448
    %v1451 = vmul.f32 %v1297, %v1407
    %v1452 = vmul.f32 %v1298, %v1408
    %v1453 = vmul.f32 %v1325, %v1413
    %v1454 = vmul.f32 %v1326, %v1414
    %v1455 = vadd.f32 %v1451, %v1453
    %v1456 = vadd.f32 %v1452, %v1454
    %v1457 = vmul.f32 %v1455, 0.6666667
    %v1458 = vmul.f32 %v1456, 0.6666667
    %v1459 = vmul.f32 %v1309, %v1413
    %v1460 = vmul.f32 %v1310, %v1414
    %v1461 = vmul.f32 %v1337, %v1419
    %v1462 = vmul.f32 %v1338, %v1420
    %v1463 = vadd.f32 %v1459, %v1461
    %v1464 = vadd.f32 %v1460, %v1462
    %v1465 = vmul.f32 %v1463, 0.6666667
    %v1466 = vmul.f32 %v1464, 0.6666667
    %v1467 = vmul.f32 %v1321, %v1419
    %v1468 = vmul.f32 %v1322, %v1420
    %v1469 = vmul.f32 %v1349, %v1425
    %v1470 = vmul.f32 %v1350, %v1426
    %v1471 = vadd.f32 %v1467, %v1469
    %v1472 = vadd.f32 %v1468, %v1470
    %v1473 = vmul.f32 %v1471, 0.6666667
    %v1474 = vmul.f32 %v1472, 0.6666667
    %v1475 = vmul.f32 %v1333, %v1425
    %v1476 = vmul.f32 %v1334, %v1426
    %v1477 = vmul.f32 %v1359, %v1431
    %v1478 = vmul.f32 %v1360, %v1432
    %v1479 = vadd.f32 %v1475, %v1477
    %v1480 = vadd.f32 %v1476, %v1478
    %v1481 = vmul.f32 %v1479, 0.6666667
    %v1482 = vmul.f32 %v1480, 0.6666667
    %v1483 = vmul.f32 %v1345, %v1431
    %v1484 = vmul.f32 %v1346, %v1432
    %v1485 = vmul.f32 %v1371, %v1437
    %v1486 = vmul.f32 %v1372, %v1438
    %v1487 = vadd.f32 %v1483, %v1485
    %v1488 = vadd.f32 %v1484, %v1486
    %v1489 = vmul.f32 %v1487, 0.6666667
    %v1490 = vmul.f32 %v1488, 0.6666667
    %v1491 = vmul.f32 %v1195, %v1437
    %v1492 = vmul.f32 %v1196, %v1438
    %v1493 = vmul.f32 %v1383, %v1443
    %v1494 = vmul.f32 %v1384, %v1444
    %v1495 = vadd.f32 %v1491, %v1493
    %v1496 = vadd.f32 %v1492, %v1494
    %v1497 = vmul.f32 %v1495, 0.6666667
    %v1498 = vmul.f32 %v1496, 0.6666667
    %v1499 = vmul.f32 %v1367, %v1443
    %v1500 = vmul.f32 %v1368, %v1444
    %v1501 = vmul.f32 %v1395, %v1449
    %v1502 = vmul.f32 %v1396, %v1450
    %v1503 = vadd.f32 %v1499, %v1501
    %v1504 = vadd.f32 %v1500, %v1502
    %v1505 = vmul.f32 %v1503, 0.6666667
    %v1506 = vmul.f32 %v1504, 0.6666667
    %v1507 = vxor.u32 %v1195, 2147483648
    %v1508 = vxor.u32 %v1196, 2147483648
    %v1509 = vmul.f32 %v1507, 1.442695
    %v1510 = vpow.pop %v1509
    %v1511 = vmul.f32 %v1508, 1.442695
    %v1512 = vpow.pop %v1511
    %v1513 = vadd.f32 %v1510, 1.0
    %v1514 = vadd.f32 %v1512, 1.0
    %v1515 = vrcp.pop %v1513
    %v1516 = vmul.f32 1.0, %v1515
    %v1517 = vrcp.pop %v1514
    %v1518 = vmul.f32 1.0, %v1517
    %v1519 = vmul.f32 %v1195, %v1516
    %v1520 = vmul.f32 %v1196, %v1518
    %1523 = vrot.lane.b32.xlu0 %v1457, 32
    %v1524 = vpop.permute.xlu0 %1523
    %1525 = vrot.lane.b32.xlu0 %v1458, 32
    %v1526 = vpop.permute.xlu0 %1525
    %1531 = vrot.lane.b32.xlu0 %v1465, 64
    %v1532 = vpop.permute.xlu0 %1531
    %1533 = vrot.lane.b32.xlu0 %v1466, 64
    %v1534 = vpop.permute.xlu0 %1533
    %1539 = vrot.lane.b32.xlu0 %v1473, 96
    %v1540 = vpop.permute.xlu0 %1539
    %1541 = vrot.lane.b32.xlu0 %v1474, 96
    %v1542 = vpop.permute.xlu0 %1541
    %1547 = vrot.lane.b32.xlu0 %v1489, 32
    %v1548 = vpop.permute.xlu0 %1547
    %1549 = vrot.lane.b32.xlu0 %v1490, 32
    %v1550 = vpop.permute.xlu0 %1549
    %1555 = vrot.lane.b32.xlu0 %v1497, 64
    %v1556 = vpop.permute.xlu0 %1555
    %1557 = vrot.lane.b32.xlu0 %v1498, 64
    %v1558 = vpop.permute.xlu0 %1557
    %1563 = vrot.lane.b32.xlu0 %v1505, 96
    %v1564 = vpop.permute.xlu0 %1563
    %1565 = vrot.lane.b32.xlu0 %v1506, 96
    %v1566 = vpop.permute.xlu0 %1565
    %v1569 = vsel %vm422, %v1519, %v1524
    %v1570 = vsel %vm422, %v1520, %v1526
    %v1571 = vsel %vm467, %v1569, %v1532
    %v1572 = vsel %vm467, %v1570, %v1534
    %v1573 = vsel %vm954, %v1571, %v1540
    %v1574 = vsel %vm954, %v1572, %v1542
    %v1575 = vsel %vm422, %v1481, %v1548
    %v1576 = vsel %vm422, %v1482, %v1550
    %v1577 = vsel %vm467, %v1575, %v1556
    %v1578 = vsel %vm467, %v1576, %v1558
    %v1579 = vsel %vm954, %v1577, %v1564
    %v1580 = vsel %vm954, %v1578, %v1566
    %v1581 = vpack.c.bf16 %v1574, %v1573
    %v1582 = vpack.c.bf16 %v1580, %v1579
    %v1583 = vld [vmem:[%s6] sm:$0xf]
    %v1584 = vld [vmem:[%s6 + $0x4] sm:$0xf]
    %v1585 = vld [vmem:[%s6 + $0x8] sm:$0xf]
    %v1586 = vld [vmem:[%s6 + $0xc] sm:$0xf]
    %v1587 = vld [vmem:[%s6 + $0x10] sm:$0xf]
    %v1588 = vld [vmem:[%s6 + $0x14] sm:$0xf]
    %v1589 = vld [vmem:[%s6 + $0x18] sm:$0xf]
    %v1590 = vld [vmem:[%s6 + $0x1c] sm:$0xf]
    %v1591 = vld [vmem:[%s6 + $0x20] sm:$0xf]
    %v1592 = vld [vmem:[%s6 + $0x24] sm:$0xf]
    %v1593 = vld [vmem:[%s6 + $0x28] sm:$0xf]
    %v1594 = vld [vmem:[%s6 + $0x2c] sm:$0xf]
    %v1595 = vld [vmem:[%s6 + $0x30] sm:$0xf]
    %v1596 = vld [vmem:[%s6 + $0x34] sm:$0xf]
    %v1597 = vld [vmem:[%s6 + $0x38] sm:$0xf]
    %v1598 = vld [vmem:[%s6 + $0x3c] sm:$0xf]
    %v1599 = vld [vmem:[%s6 + $0x40] sm:$0xf]
    %v1600 = vld [vmem:[%s6 + $0x44] sm:$0xf]
    %v1601 = vld [vmem:[%s6 + $0x48] sm:$0xf]
    %v1602 = vld [vmem:[%s6 + $0x4c] sm:$0xf]
    %v1603 = vld [vmem:[%s6 + $0x50] sm:$0xf]
    %v1604 = vld [vmem:[%s6 + $0x54] sm:$0xf]
    %v1605 = vld [vmem:[%s6 + $0x58] sm:$0xf]
    %v1606 = vld [vmem:[%s6 + $0x5c] sm:$0xf]
    %v1607 = vld [vmem:[%s6 + $0x60] sm:$0xf]
    %v1608 = vld [vmem:[%s6 + $0x64] sm:$0xf]
    %v1609 = vld [vmem:[%s6 + $0x68] sm:$0xf]
    %v1610 = vld [vmem:[%s6 + $0x6c] sm:$0xf]
    %v1611 = vld [vmem:[%s6 + $0x70] sm:$0xf]
    %v1612 = vld [vmem:[%s6 + $0x74] sm:$0xf]
    %v1613 = vld [vmem:[%s6 + $0x78] sm:$0xf]
    %v1614 = vld [vmem:[%s6 + $0x7c] sm:$0xf]
    %v1647 = vunpack.c.l.b16 %v1583
    %v1648 = vunpack.c.l.b16 %v1584
    %v1649 = vunpack.c.l.b16 %v1585
    %v1650 = vunpack.c.l.b16 %v1586
    %v1651 = vunpack.c.l.b16 %v1587
    %v1652 = vunpack.c.l.b16 %v1588
    %v1653 = vunpack.c.l.b16 %v1589
    %v1654 = vunpack.c.l.b16 %v1590
    %v1655 = vunpack.c.l.b16 %v1591
    %v1656 = vunpack.c.l.b16 %v1592
    %v1657 = vunpack.c.l.b16 %v1593
    %v1658 = vunpack.c.l.b16 %v1594
    %v1659 = vunpack.c.l.b16 %v1595
    %v1660 = vunpack.c.l.b16 %v1596
    %v1661 = vunpack.c.l.b16 %v1597
    %v1662 = vunpack.c.l.b16 %v1598
    %v1663 = vunpack.c.l.b16 %v1599
    %v1664 = vunpack.c.l.b16 %v1600
    %v1665 = vunpack.c.l.b16 %v1601
    %v1666 = vunpack.c.l.b16 %v1602
    %v1667 = vunpack.c.l.b16 %v1603
    %v1668 = vunpack.c.l.b16 %v1604
    %v1669 = vunpack.c.l.b16 %v1605
    %v1670 = vunpack.c.l.b16 %v1606
    %v1671 = vunpack.c.l.b16 %v1607
    %v1672 = vunpack.c.l.b16 %v1608
    %v1673 = vunpack.c.l.b16 %v1609
    %v1674 = vunpack.c.l.b16 %v1610
    %v1675 = vunpack.c.l.b16 %v1611
    %v1676 = vunpack.c.l.b16 %v1612
    %v1677 = vunpack.c.l.b16 %v1613
    %v1678 = vunpack.c.l.b16 %v1614
    %v1679 = vpack.c.b16 %v1648, %v1647
    %v1680 = vpack.c.b16 %v1650, %v1649
    %v1681 = vpack.c.b16 %v1652, %v1651
    %v1682 = vpack.c.b16 %v1654, %v1653
    %v1683 = vpack.c.b16 %v1656, %v1655
    %v1684 = vpack.c.b16 %v1658, %v1657
    %v1685 = vpack.c.b16 %v1660, %v1659
    %v1686 = vpack.c.b16 %v1662, %v1661
    %v1687 = vpack.c.b16 %v1664, %v1663
    %v1688 = vpack.c.b16 %v1666, %v1665
    %v1689 = vpack.c.b16 %v1668, %v1667
    %v1690 = vpack.c.b16 %v1670, %v1669
    %v1691 = vpack.c.b16 %v1672, %v1671
    %v1692 = vpack.c.b16 %v1674, %v1673
    %v1693 = vpack.c.b16 %v1676, %v1675
    %v1694 = vpack.c.b16 %v1678, %v1677
    %1711 = vmatprep.subr.bf16.mxu0 0
    %1712 = vmatpush1.bf16.msra.mxu0 %v1686
    %1713 = vmatprep.subr.bf16.mxu0 0
    %1714 = vmatpush1.bf16.msra.mxu0 %v1685
    %1715 = vmatprep.subr.bf16.mxu0 0
    %1716 = vmatpush1.bf16.msra.mxu0 %v1684
    %1717 = vmatprep.subr.bf16.mxu0 0
    %1718 = vmatpush1.bf16.msra.mxu0 %v1683
    %1719 = vmatprep.subr.bf16.mxu0 0
    %1720 = vmatpush1.bf16.msra.mxu0 %v1682
    %1721 = vmatprep.subr.bf16.mxu0 0
    %1722 = vmatpush1.bf16.msra.mxu0 %v1681
    %1723 = vmatprep.subr.bf16.mxu0 0
    %1724 = vmatpush1.bf16.msra.mxu0 %v1680
    %1725 = vmatprep.subr.bf16.mxu0 0
    %1726 = vmatpush1.bf16.msra.mxu0 %v1679
    %1727 = vmatprep.subr.bf16.mxu0 0
    %1728 = vmatpush2.bf16.msra.mxu0 %v1694
    %1729 = vmatprep.subr.bf16.mxu0 0
    %1730 = vmatpush2.bf16.msra.mxu0 %v1693
    %1731 = vmatprep.subr.bf16.mxu0 0
    %1732 = vmatpush2.bf16.msra.mxu0 %v1692
    %1733 = vmatprep.subr.bf16.mxu0 0
    %1734 = vmatpush2.bf16.msra.mxu0 %v1691
    %1735 = vmatprep.subr.bf16.mxu0 0
    %1736 = vmatpush2.bf16.msra.mxu0 %v1690
    %1737 = vmatprep.subr.bf16.mxu0 0
    %1738 = vmatpush2.bf16.msra.mxu0 %v1689
    %1739 = vmatprep.subr.bf16.mxu0 0
    %1740 = vmatpush2.bf16.msra.mxu0 %v1688
    %1741 = vmatprep.subr.bf16.mxu0 0
    %1742 = vmatpush2.bf16.msra.mxu0 %v1687
    %1743 = vmatprep.mubr.bf16.mxu0 %v1582
    %1744 = vmatmul.mubr.bf16.gmra.mxu0 %v1581
    %v1745 = vpop.f32.mrf.mxu0
    %v1746 = vadd.f32 0.0, %v1745
    %v1747 = vpop.f32.mrf.mxu0
    %v1748 = vpop.f32.mrf.mxu0
    %v1749 = vadd.f32 0.0, %v1748
    %v1750 = vpop.f32.mrf.mxu0
    %1751 = vdwg.mxu0
    %v1752 = vlaneseq
    %v1753 = vand.u32 %v1752, 127
    %vm1754 = vcmp.lt.s32.totalorder %v1753, 4
    %v1755 = vsel %vm1754, 1, 0
    %vm1756 = vcmp.eq.s32.totalorder %v1755, 1
    %v1757 = vsel %vm1756, %v1746, -1e+30
    %v1758 = vsel %vm1756, %v1749, -1e+30
    %1759 = vmax.xlane.f32.xlu0 %v1757
    %v1760 = vpop.xlane.xlu0 %1759
    %1761 = vmax.xlane.f32.xlu0 %v1758
    %v1762 = vpop.xlane.xlu0 %1761
    %v1763 = vsub.f32 %v1757, %v1760
    %v1764 = vsub.f32 %v1758, %v1762
    %v1765 = vmul.f32 %v1763, 1.442695
    %v1766 = vpow.pop %v1765
    %v1767 = vmul.f32 %v1764, 1.442695
    %v1768 = vpow.pop %v1767
    %1769 = vadd.xlane.f32.xlu0 %v1766
    %v1770 = vpop.xlane.xlu0 %1769
    %1771 = vadd.xlane.f32.xlu0 %v1768
    %v1772 = vpop.xlane.xlu0 %1771
    %v1773 = vlog2.pop %v1770
    %v1774 = vmul.f32 %v1773, 0.6931472
    %v1775 = vlog2.pop %v1772
    %v1776 = vmul.f32 %v1775, 0.6931472
    %v1777 = vsub.f32 %v1763, %v1774
    %v1778 = vsub.f32 %v1764, %v1776
    %1779 = vst [vmem:[#allocation2] sm:$0xff] %v1777
    %1780 = vst [vmem:[#allocation2 + $0x8] sm:$0xff] %v1778
    // Predicated region
    $region30: #{tpu_custom_call.1} parent=1 // pred_check
      _
    $region31: #{tpu_custom_call.1} parent=1 // pred_check_branch
      %1782 = sbr.rel (0) target = $region33
    $region32: #{tpu_custom_call.1} parent=1 // pred_region
      %s1784 = ssub.s32 256, 256
      %1785 = vsyncadd [#allocation3], %s1784
      %s1786 = sshll.u32 [#allocation2], 4
      %s1787 = int_to_ptr.vmem [resolvable:$true] %s1786
      %1792 = dma.vmem_to_hbm [thread:$0]  %s1787, 256, %s7, [#allocation3], 128, 128, 8
    $region33: #{tpu_custom_call.1} parent=1 // pred_fallthru
      _
    // Predicated region
    $region34: #{tpu_custom_call.1} parent=1 // pred_check
      _
    $region35: #{tpu_custom_call.1} parent=1 // pred_check_branch
      %1794 = sbr.rel (0) target = $region37
    $region36: #{tpu_custom_call.1} parent=1 // pred_region
      %1795 = dma.done [#allocation3], 256
    $region37: #{tpu_custom_call.1} parent=1 // pred_fallthru
      _
    %1796 = vsyncpa [#allocation3], 1

</llo_original>
